<compile_context>
chip_gen: v5e
topology: v5e:2x2
jax: 0.10.0
libtpu: 0.0.40
codegen_flags: <defaults>
</compile_context>

<pallas_src>
import functools
import math

import jax
import jax.numpy as jnp
from jax import lax
from jax.experimental import pallas as pl
from jax.experimental.pallas import tpu as pltpu


# ----------------------------- in-kernel helpers -----------------------------
def _layernorm(x, gamma, beta, eps):
    mu = jnp.mean(x, axis=-1, keepdims=True)
    var = jnp.mean((x - mu) ** 2, axis=-1, keepdims=True)
    return (x - mu) * lax.rsqrt(var + eps) * gamma + beta


def _gelu_tanh(x):
    # tanh-form GELU: single EUP tanh instead of a long VALU erf polynomial.
    # TODO(synk): torch nn.GELU() uses exact erf; tanh form differs by ~1e-3 rel.
    c = 0.7978845608028654  # sqrt(2/pi)
    return 0.5 * x * (1.0 + jnp.tanh(c * (x + 0.044715 * x * x * x)))


# --------------------------------- the kernel --------------------------------
def block_kernel(
    x_ref,
    ln1_ref, wq_ref, bq_ref,
    wred_ref, bred_ref, bnr_ref,
    wf_ref, bf_ref, bnf_ref,
    lnkv_ref, wkv_ref, bkv_ref,
    wpa_ref, wpb_ref, bp_ref,
    ln2_ref, w1_ref, b1_ref, w2_ref, b2_ref,
    o_ref,
    red_scr, idwt_scr, kv_scr, attn_scr,
    *, num_heads, tq,
):
    qi = pl.program_id(1)
    N, C = x_ref.shape
    C4 = C // 4
    L4 = N // 4
    hd = C // num_heads
    scale = 1.0 / math.sqrt(hd)
    f32 = jnp.float32
    bf16 = jnp.bfloat16

    # -------- sequence-level branch: runs once per batch element (qi == 0) ------
    @pl.when(qi == 0)
    def _():
        xb = x_ref[...]                                          # (N, C)
        ln1 = ln1_ref[...]
        xn = _layernorm(xb, ln1[0:1], ln1[1:2], 1e-6)

        # reduce: 1x1 conv (channel mixing) + folded BN(eval) + ReLU
        r = (jnp.dot(xn.astype(bf16), wred_ref[...],
                     preferred_element_type=f32) + bred_ref[...])
        bnr = bnr_ref[...]
        r = jnp.maximum(r * bnr[0:1] + bnr[1:2], 0.0)            # (N, C/4)
        red_scr[...] = r

        # Two-level Haar wavelet packet transform along length:
        # pure add/sub on 4-strided rows (strided ref loads, no operator matmul).
        g0 = red_scr[pl.ds(0, L4, stride=4), :]
        g1 = red_scr[pl.ds(1, L4, stride=4), :]
        g2 = red_scr[pl.ds(2, L4, stride=4), :]
        g3 = red_scr[pl.ds(3, L4, stride=4), :]
        s01, d01 = g0 + g1, g0 - g1
        s23, d23 = g2 + g3, g2 - g3
        ll = 0.5 * (s01 + s23)
        lh = 0.5 * (s01 - s23)
        hl = 0.5 * (d01 + d23)
        hh = 0.5 * (d01 - d23)
        xdwt = jnp.concatenate([ll, lh, hl, hh], axis=-1)        # (L/4, C)

        # filter: conv1d(k=3, pad=1) fused into ONE matmul: shifted copies are
        # stacked along lanes and hit the host-stacked (3C, C) tap matrix.
        zrow = jnp.zeros((1, C), f32)
        xm = jnp.concatenate([zrow, xdwt[:L4 - 1, :]], axis=0)   # x[t-1], zero pad
        xp = jnp.concatenate([xdwt[1:, :], zrow], axis=0)        # x[t+1], zero pad
        xin3 = jnp.concatenate([xm, xdwt, xp], axis=-1)          # (L/4, 3C)
        filt = (jnp.dot(xin3.astype(bf16), wf_ref[...],
                        preferred_element_type=f32) + bf_ref[...])
        bnf = bnf_ref[...]
        xdf = jnp.maximum(filt * bnf[0:1] + bnf[1:2], 0.0)       # (L/4, C)

        # inverse two-level Haar DWPT: add/sub + strided row-interleave stores.
        cll = xdf[:, 0:C4]
        clh = xdf[:, C4:2 * C4]
        chl = xdf[:, 2 * C4:3 * C4]
        chh = xdf[:, 3 * C4:]
        sA, dA = cll + clh, cll - clh
        sB, dB = chl + chh, chl - chh
        idwt_scr[pl.ds(0, L4, stride=4), :] = 0.5 * (dA - dB)
        idwt_scr[pl.ds(1, L4, stride=4), :] = 0.5 * (dA + dB)
        idwt_scr[pl.ds(2, L4, stride=4), :] = 0.5 * (sA - sB)
        idwt_scr[pl.ds(3, L4, stride=4), :] = 0.5 * (sA + sB)

        # kv: LayerNorm + Linear (sr_ratio == 1 -> kv_embed is Identity)
        lnkv = lnkv_ref[...]
        kvin = _layernorm(xdf, lnkv[0:1], lnkv[1:2], 1e-5)
        kv_scr[...] = (jnp.dot(kvin.astype(bf16), wkv_ref[...],
                               preferred_element_type=f32) + bkv_ref[...])

    # -------- per-query-tile branch (every grid step) --------
    l0 = pl.multiple_of(qi * tq, tq)
    xt = x_ref[pl.ds(l0, tq), :]                                 # (tq, C)
    ln1 = ln1_ref[...]
    xn_t = _layernorm(xt, ln1[0:1], ln1[1:2], 1e-6)

    q = (jnp.dot(xn_t.astype(bf16), wq_ref[...],
                 preferred_element_type=f32) + bq_ref[...])      # (tq, C)

    kvp = kv_scr[...]                                            # (L/4, 2C)
    k_all = kvp[:, :C].astype(bf16)
    v_all = kvp[:, C:].astype(bf16)

    # Per-head attention on the tq tile; each head's output goes straight into
    # a fixed lane slice of VMEM scratch (no lane-axis concatenate, bounded
    # live ranges), followed by one deep (tq, C) @ (C, C) projection matmul.
    for h in range(num_heads):
        sl = slice(h * hd, (h + 1) * hd)
        qh = q[:, sl].astype(bf16)
        att = lax.dot_general(qh, k_all[:, sl], (((1,), (1,)), ((), ())),
                              preferred_element_type=f32) * scale
        att = jnp.exp(att - jnp.max(att, axis=-1, keepdims=True))
        att = att * pl.reciprocal(jnp.sum(att, axis=-1, keepdims=True),
                                  approx=True)
        attn_scr[:, sl] = jnp.dot(att.astype(bf16), v_all[:, sl],
                                  preferred_element_type=f32)

    att_out = attn_scr[...]                                      # (tq, C)
    xidwt_t = idwt_scr[pl.ds(l0, tq), :]                         # (tq, C/4)

    # proj([attn | idwt]) without the concat: split weight, shared accumulator.
    attn_branch = (jnp.dot(att_out.astype(bf16), wpa_ref[...],
                           preferred_element_type=f32)
                   + jnp.dot(xidwt_t.astype(bf16), wpb_ref[...],
                             preferred_element_type=f32)
                   + bp_ref[...])

    x1 = xt + attn_branch                                        # residual 1

    # ---- MLP branch ----
    ln2 = ln2_ref[...]
    xn2 = _layernorm(x1, ln2[0:1], ln2[1:2], 1e-6)
    h1 = (jnp.dot(xn2.astype(bf16), w1_ref[...],
                  preferred_element_type=f32) + b1_ref[...])
    h1 = _gelu_tanh(h1)
    mlp = (jnp.dot(h1.astype(bf16), w2_ref[...],
                   preferred_element_type=f32) + b2_ref[...])

    o_ref[...] = x1 + mlp                                        # residual 2


# ------------------------------ host-side setup -------------------------------
def fold_bn(gamma, beta, mean, var, eps=1e-5):
    """Fold BatchNorm1d (eval mode) running stats into a (2, C') scale/shift."""
    scale = gamma / jnp.sqrt(var + eps)
    shift = beta - mean * scale
    return jnp.stack([scale, shift]).astype(jnp.float32)


def init_params(key, dim):
    C, C4 = dim, dim // 4
    ks = jax.random.split(key, 32)
    bf16 = jnp.bfloat16

    def w(k, shape, scale=0.05):
        return scale * jax.random.normal(k, shape, jnp.float32)

    params = [
        jnp.stack([1.0 + w(ks[0], (C,), 0.1), w(ks[1], (C,), 0.1)]),        # ln1 (gamma, beta)
        w(ks[2], (C, C)).astype(bf16), w(ks[3], (1, C)),                     # q
        w(ks[4], (C, C4)).astype(bf16), w(ks[5], (1, C4)),                   # reduce 1x1 conv
        fold_bn(1.0 + w(ks[6], (C4,), 0.1), w(ks[7], (C4,), 0.1),
                w(ks[8], (C4,), 0.1), 1.0 + jnp.abs(w(ks[9], (C4,), 0.1))),  # reduce BN (folded)
        w(ks[10], (3 * C, C)).astype(bf16), w(ks[11], (1, C)),               # filter taps stacked [t-1|t|t+1]
        fold_bn(1.0 + w(ks[12], (C,), 0.1), w(ks[13], (C,), 0.1),
                w(ks[14], (C,), 0.1), 1.0 + jnp.abs(w(ks[15], (C,), 0.1))),  # filter BN (folded)
        jnp.stack([1.0 + w(ks[16], (C,), 0.1), w(ks[17], (C,), 0.1)]),       # kv LayerNorm
        w(ks[18], (C, 2 * C)).astype(bf16), w(ks[19], (1, 2 * C)),           # kv Linear
        w(ks[20], (C, C)).astype(bf16),                                      # proj (attention half)
        w(ks[21], (C4, C)).astype(bf16),                                     # proj (idwt half)
        w(ks[22], (1, C)),                                                   # proj bias
        jnp.stack([1.0 + w(ks[23], (C,), 0.1), w(ks[24], (C,), 0.1)]),       # ln2
        w(ks[25], (C, 4 * C)).astype(bf16), w(ks[26], (1, 4 * C)),           # mlp fc1
        w(ks[27], (4 * C, C)).astype(bf16), w(ks[28], (1, C)),               # mlp fc2
    ]
    return params


def _const_spec(shape):
    zeros = (0,) * len(shape)
    return pl.BlockSpec(tuple(shape), lambda b, qi, _z=zeros: _z)


def wave_block_forward(x, params, num_heads, tq=None):
    B, N, C = x.shape
    assert N % 4 == 0 and N >= 8, "sequence length must be a multiple of 4 (>= 8)"
    assert C % 4 == 0 and C % num_heads == 0
    C4 = C // 4
    if tq is None:
        tq = N if N <= 128 else 128
    assert N % tq == 0 and (tq % 8 == 0 or tq == N)
    n_tiles = N // tq

    in_specs = [pl.BlockSpec((pl.Squeezed(), N, C), lambda b, qi: (b, 0, 0))]
    in_specs += [_const_spec(p.shape) for p in params]

    grid_spec = pltpu.PrefetchScalarGridSpec(
        num_scalar_prefetch=0,
        grid=(B, n_tiles),
        in_specs=in_specs,
        out_specs=pl.BlockSpec((pl.Squeezed(), tq, C), lambda b, qi: (b, qi, 0)),
        scratch_shapes=[
            pltpu.VMEM((N, C4), jnp.float32),          # reduce output (DWPT input)
            pltpu.VMEM((N, C4), jnp.float32),          # IDWPT output
            pltpu.VMEM((N // 4, 2 * C), jnp.float32),  # kv projections (k|v)
            pltpu.VMEM((tq, C), jnp.float32),          # per-tile head outputs
        ],
    )
    return pl.pallas_call(
        functools.partial(block_kernel, num_heads=num_heads, tq=tq),
        out_shape=jax.ShapeDtypeStruct((B, N, C), jnp.float32),
        grid_spec=grid_spec,
        compiler_params=pltpu.CompilerParams(
            dimension_semantics=("parallel", "arbitrary"),
            vmem_limit_bytes=32 * 1024 * 1024,
        ),
    )(x, *params)


if __name__ == "__main__":
    B, L, dim, num_heads = 2, 16, 32, 4          # N == L; L divisible by 4
    key = jax.random.PRNGKey(0)
    kx, kp = jax.random.split(key)
    x = jax.random.normal(kx, (B, L, dim), jnp.float32)
    params = init_params(kp, dim)

    out = wave_block_forward(x, params, num_heads, tq=8)   # 2 query tiles per batch elem
    out = jax.block_until_ready(out)

    assert out.shape == (B, L, dim)
    assert bool(jnp.all(jnp.isfinite(out)))
    # TODO(synk): BatchNorm uses eval-mode running stats folded on the host;
    # training-mode (data-dependent) batch statistics are intentionally not replicated.
    print("KERNEL_OK")
</pallas_src>

<mosaic_0001>
module attributes {stable_mosaic.version = 11 : i64} {
  func.func @block_kernel(%arg0: i32, %arg1: i32, %arg2: memref<1x16x32xf32, #tpu.memory_space<vmem>>, %arg3: memref<2x32xf32, #tpu.memory_space<vmem>>, %arg4: memref<32x32xbf16, #tpu.memory_space<vmem>>, %arg5: memref<1x32xf32, #tpu.memory_space<vmem>>, %arg6: memref<32x8xbf16, #tpu.memory_space<vmem>>, %arg7: memref<1x8xf32, #tpu.memory_space<vmem>>, %arg8: memref<2x8xf32, #tpu.memory_space<vmem>>, %arg9: memref<96x32xbf16, #tpu.memory_space<vmem>>, %arg10: memref<1x32xf32, #tpu.memory_space<vmem>>, %arg11: memref<2x32xf32, #tpu.memory_space<vmem>>, %arg12: memref<2x32xf32, #tpu.memory_space<vmem>>, %arg13: memref<32x64xbf16, #tpu.memory_space<vmem>>, %arg14: memref<1x64xf32, #tpu.memory_space<vmem>>, %arg15: memref<32x32xbf16, #tpu.memory_space<vmem>>, %arg16: memref<8x32xbf16, #tpu.memory_space<vmem>>, %arg17: memref<1x32xf32, #tpu.memory_space<vmem>>, %arg18: memref<2x32xf32, #tpu.memory_space<vmem>>, %arg19: memref<32x128xbf16, #tpu.memory_space<vmem>>, %arg20: memref<1x128xf32, #tpu.memory_space<vmem>>, %arg21: memref<128x32xbf16, #tpu.memory_space<vmem>>, %arg22: memref<1x32xf32, #tpu.memory_space<vmem>>, %arg23: memref<1x8x32xf32, #tpu.memory_space<vmem>>, %arg24: memref<16x8xf32, #tpu.memory_space<vmem>>, %arg25: memref<16x8xf32, #tpu.memory_space<vmem>>, %arg26: memref<4x64xf32, #tpu.memory_space<vmem>>, %arg27: memref<8x32xf32, #tpu.memory_space<vmem>>) attributes {dimension_semantics = [#tpu.dimension_semantics<parallel>, #tpu.dimension_semantics<arbitrary>], iteration_bounds = array<i64: 2, 2>, scalar_prefetch = 0 : i64, scratch_operands = 4 : i64, tpu.core_type = #tpu.core_type<tc>, window_params = [{transform_indices = @transform_0, window_bounds = array<i64: 1, 16, 32>}, {pipeline_mode = #tpu.pipeline_mode<synchronous>, transform_indices = @transform_1, window_bounds = array<i64: 2, 32>}, {pipeline_mode = #tpu.pipeline_mode<synchronous>, transform_indices = @transform_2, window_bounds = array<i64: 32, 32>}, {pipeline_mode = #tpu.pipeline_mode<synchronous>, transform_indices = @transform_3, window_bounds = array<i64: 1, 32>}, {pipeline_mode = #tpu.pipeline_mode<synchronous>, transform_indices = @transform_4, window_bounds = array<i64: 32, 8>}, {pipeline_mode = #tpu.pipeline_mode<synchronous>, transform_indices = @transform_5, window_bounds = array<i64: 1, 8>}, {pipeline_mode = #tpu.pipeline_mode<synchronous>, transform_indices = @transform_6, window_bounds = array<i64: 2, 8>}, {pipeline_mode = #tpu.pipeline_mode<synchronous>, transform_indices = @transform_7, window_bounds = array<i64: 96, 32>}, {pipeline_mode = #tpu.pipeline_mode<synchronous>, transform_indices = @transform_8, window_bounds = array<i64: 1, 32>}, {pipeline_mode = #tpu.pipeline_mode<synchronous>, transform_indices = @transform_9, window_bounds = array<i64: 2, 32>}, {pipeline_mode = #tpu.pipeline_mode<synchronous>, transform_indices = @transform_10, window_bounds = array<i64: 2, 32>}, {pipeline_mode = #tpu.pipeline_mode<synchronous>, transform_indices = @transform_11, window_bounds = array<i64: 32, 64>}, {pipeline_mode = #tpu.pipeline_mode<synchronous>, transform_indices = @transform_12, window_bounds = array<i64: 1, 64>}, {pipeline_mode = #tpu.pipeline_mode<synchronous>, transform_indices = @transform_13, window_bounds = array<i64: 32, 32>}, {pipeline_mode = #tpu.pipeline_mode<synchronous>, transform_indices = @transform_14, window_bounds = array<i64: 8, 32>}, {pipeline_mode = #tpu.pipeline_mode<synchronous>, transform_indices = @transform_15, window_bounds = array<i64: 1, 32>}, {pipeline_mode = #tpu.pipeline_mode<synchronous>, transform_indices = @transform_16, window_bounds = array<i64: 2, 32>}, {pipeline_mode = #tpu.pipeline_mode<synchronous>, transform_indices = @transform_17, window_bounds = array<i64: 32, 128>}, {pipeline_mode = #tpu.pipeline_mode<synchronous>, transform_indices = @transform_18, window_bounds = array<i64: 1, 128>}, {pipeline_mode = #tpu.pipeline_mode<synchronous>, transform_indices = @transform_19, window_bounds = array<i64: 128, 32>}, {pipeline_mode = #tpu.pipeline_mode<synchronous>, transform_indices = @transform_20, window_bounds = array<i64: 1, 32>}, {transform_indices = @transform_21, window_bounds = array<i64: 1, 8, 32>}]} {
    %c0_i32 = arith.constant 0 : i32
    %0 = arith.cmpi eq, %arg1, %c0_i32 : i32
    %1 = arith.extui %0 : i1 to i32
    %c0_i32_0 = arith.constant 0 : i32
    %2 = arith.cmpi ne, %1, %c0_i32_0 : i32
    scf.if %2 {
      %c0_75 = arith.constant 0 : index
      %c0_76 = arith.constant 0 : index
      %c0_77 = arith.constant 0 : index
      %192 = vector.load %arg2[%c0_75, %c0_76, %c0_77] : memref<1x16x32xf32, #tpu.memory_space<vmem>>, vector<1x16x32xf32>
      %193 = vector.shape_cast %192 : vector<1x16x32xf32> to vector<16x32xf32>
      %c0_78 = arith.constant 0 : index
      %c0_79 = arith.constant 0 : index
      %194 = vector.load %arg3[%c0_78, %c0_79] : memref<2x32xf32, #tpu.memory_space<vmem>>, vector<2x32xf32>
      %195 = vector.extract_strided_slice %194 {offsets = [0, 0], sizes = [1, 32], strides = [1, 1]} : vector<2x32xf32> to vector<1x32xf32>
      %196 = vector.extract_strided_slice %194 {offsets = [1, 0], sizes = [1, 32], strides = [1, 1]} : vector<2x32xf32> to vector<1x32xf32>
      %cst_80 = arith.constant dense<0.000000e+00> : vector<16xf32>
      %197 = vector.multi_reduction <add>, %193, %cst_80 [1] : vector<16x32xf32> to vector<16xf32>
      %198 = vector.shape_cast %197 : vector<16xf32> to vector<16x1xf32>
      %cst_81 = arith.constant 3.200000e+01 : f32
      %199 = vector.broadcast %cst_81 : f32 to vector<16x1xf32>
      %200 = arith.divf %198, %199 : vector<16x1xf32>
      %201 = vector.broadcast %200 : vector<16x1xf32> to vector<16x32xf32>
      %202 = arith.subf %193, %201 : vector<16x32xf32>
      %203 = arith.mulf %202, %202 : vector<16x32xf32>
      %cst_82 = arith.constant dense<0.000000e+00> : vector<16xf32>
      %204 = vector.multi_reduction <add>, %203, %cst_82 [1] : vector<16x32xf32> to vector<16xf32>
      %205 = vector.shape_cast %204 : vector<16xf32> to vector<16x1xf32>
      %cst_83 = arith.constant 3.200000e+01 : f32
      %206 = vector.broadcast %cst_83 : f32 to vector<16x1xf32>
      %207 = arith.divf %205, %206 : vector<16x1xf32>
      %208 = vector.broadcast %200 : vector<16x1xf32> to vector<16x32xf32>
      %209 = arith.subf %193, %208 : vector<16x32xf32>
      %cst_84 = arith.constant 9.99999997E-7 : f32
      %210 = vector.broadcast %cst_84 : f32 to vector<16x1xf32>
      %211 = arith.addf %207, %210 : vector<16x1xf32>
      %212 = math.rsqrt %211 : vector<16x1xf32>
      %213 = vector.broadcast %212 : vector<16x1xf32> to vector<16x32xf32>
      %214 = arith.mulf %209, %213 : vector<16x32xf32>
      %215 = vector.broadcast %195 : vector<1x32xf32> to vector<16x32xf32>
      %216 = arith.mulf %214, %215 : vector<16x32xf32>
      %217 = vector.broadcast %196 : vector<1x32xf32> to vector<16x32xf32>
      %218 = arith.addf %216, %217 : vector<16x32xf32>
      %219 = arith.truncf %218 : vector<16x32xf32> to vector<16x32xbf16>
      %c0_85 = arith.constant 0 : index
      %c0_86 = arith.constant 0 : index
      %220 = vector.load %arg6[%c0_85, %c0_86] : memref<32x8xbf16, #tpu.memory_space<vmem>>, vector<32x8xbf16>
      %cst_87 = arith.constant dense<0.000000e+00> : vector<16x8xf32>
      %221 = tpu.matmul %219, %220, %cst_87 {dimension_numbers = #tpu.dot_dimension_numbers<[1], [0], [0], [1], [0, 0, 1, 1], [], []>} : vector<16x32xbf16>, vector<32x8xbf16>, vector<16x8xf32> -> vector<16x8xf32>
      %c0_88 = arith.constant 0 : index
      %c0_89 = arith.constant 0 : index
      %222 = vector.load %arg7[%c0_88, %c0_89] : memref<1x8xf32, #tpu.memory_space<vmem>>, vector<1x8xf32>
      %223 = vector.broadcast %222 : vector<1x8xf32> to vector<16x8xf32>
      %224 = arith.addf %221, %223 : vector<16x8xf32>
      %c0_90 = arith.constant 0 : index
      %c0_91 = arith.constant 0 : index
      %225 = vector.load %arg8[%c0_90, %c0_91] : memref<2x8xf32, #tpu.memory_space<vmem>>, vector<2x8xf32>
      %226 = vector.extract_strided_slice %225 {offsets = [0, 0], sizes = [1, 8], strides = [1, 1]} : vector<2x8xf32> to vector<1x8xf32>
      %227 = vector.broadcast %226 : vector<1x8xf32> to vector<16x8xf32>
      %228 = arith.mulf %224, %227 : vector<16x8xf32>
      %229 = vector.extract_strided_slice %225 {offsets = [1, 0], sizes = [1, 8], strides = [1, 1]} : vector<2x8xf32> to vector<1x8xf32>
      %230 = vector.broadcast %229 : vector<1x8xf32> to vector<16x8xf32>
      %231 = arith.addf %228, %230 : vector<16x8xf32>
      %cst_92 = arith.constant 0.000000e+00 : f32
      %232 = vector.broadcast %cst_92 : f32 to vector<16x8xf32>
      %233 = arith.maximumf %231, %232 : vector<16x8xf32>
      %c0_93 = arith.constant 0 : index
      %c0_94 = arith.constant 0 : index
      %234 = vector.load %arg24[%c0_93, %c0_94] : memref<16x8xf32, #tpu.memory_space<vmem>>, vector<16x8xf32>
      tpu.vector_store %arg24[%c0_93, %c0_94], %233 {strides = array<i32>} : memref<16x8xf32, #tpu.memory_space<vmem>>, vector<16x8xf32>,
      %c0_95 = arith.constant 0 : index
      %c0_96 = arith.constant 0 : index
      %235 = tpu.strided_load %arg24[%c0_95, %c0_96] {strides = array<i32: 4, 1>} : memref<16x8xf32, #tpu.memory_space<vmem>>, vector<4x8xf32>
      %c1 = arith.constant 1 : index
      %c0_97 = arith.constant 0 : index
      %236 = tpu.strided_load %arg24[%c1, %c0_97] {strides = array<i32: 4, 1>} : memref<16x8xf32, #tpu.memory_space<vmem>>, vector<4x8xf32>
      %c2 = arith.constant 2 : index
      %c0_98 = arith.constant 0 : index
      %237 = tpu.strided_load %arg24[%c2, %c0_98] {strides = array<i32: 4, 1>} : memref<16x8xf32, #tpu.memory_space<vmem>>, vector<4x8xf32>
      %c3 = arith.constant 3 : index
      %c0_99 = arith.constant 0 : index
      %238 = tpu.strided_load %arg24[%c3, %c0_99] {strides = array<i32: 4, 1>} : memref<16x8xf32, #tpu.memory_space<vmem>>, vector<4x8xf32>
      %239 = arith.addf %235, %236 : vector<4x8xf32>
      %240 = arith.subf %235, %236 : vector<4x8xf32>
      %241 = arith.addf %237, %238 : vector<4x8xf32>
      %242 = arith.subf %237, %238 : vector<4x8xf32>
      %243 = arith.addf %239, %241 : vector<4x8xf32>
      %cst_100 = arith.constant 5.000000e-01 : f32
      %244 = vector.broadcast %cst_100 : f32 to vector<4x8xf32>
      %245 = arith.mulf %244, %243 : vector<4x8xf32>
      %246 = arith.subf %239, %241 : vector<4x8xf32>
      %cst_101 = arith.constant 5.000000e-01 : f32
      %247 = vector.broadcast %cst_101 : f32 to vector<4x8xf32>
      %248 = arith.mulf %247, %246 : vector<4x8xf32>
      %249 = arith.addf %240, %242 : vector<4x8xf32>
      %cst_102 = arith.constant 5.000000e-01 : f32
      %250 = vector.broadcast %cst_102 : f32 to vector<4x8xf32>
      %251 = arith.mulf %250, %249 : vector<4x8xf32>
      %252 = arith.subf %240, %242 : vector<4x8xf32>
      %cst_103 = arith.constant 5.000000e-01 : f32
      %253 = vector.broadcast %cst_103 : f32 to vector<4x8xf32>
      %254 = arith.mulf %253, %252 : vector<4x8xf32>
      %255 = tpu.concatenate %245, %248, %251, %254 in 1 : vector<4x8xf32>, vector<4x8xf32>, vector<4x8xf32>, vector<4x8xf32> -> vector<4x32xf32>
      %cst_104 = arith.constant 0.000000e+00 : f32
      %256 = vector.broadcast %cst_104 : f32 to vector<1x32xf32>
      %257 = vector.extract_strided_slice %255 {offsets = [0, 0], sizes = [3, 32], strides = [1, 1]} : vector<4x32xf32> to vector<3x32xf32>
      %258 = tpu.concatenate %256, %257 in 0 : vector<1x32xf32>, vector<3x32xf32> -> vector<4x32xf32>
      %259 = vector.extract_strided_slice %255 {offsets = [1, 0], sizes = [3, 32], strides = [1, 1]} : vector<4x32xf32> to vector<3x32xf32>
      %260 = tpu.concatenate %259, %256 in 0 : vector<3x32xf32>, vector<1x32xf32> -> vector<4x32xf32>
      %261 = tpu.concatenate %258, %255, %260 in 1 : vector<4x32xf32>, vector<4x32xf32>, vector<4x32xf32> -> vector<4x96xf32>
      %262 = arith.truncf %261 : vector<4x96xf32> to vector<4x96xbf16>
      %c0_105 = arith.constant 0 : index
      %c0_106 = arith.constant 0 : index
      %263 = vector.load %arg9[%c0_105, %c0_106] : memref<96x32xbf16, #tpu.memory_space<vmem>>, vector<96x32xbf16>
      %cst_107 = arith.constant dense<0.000000e+00> : vector<4x32xf32>
      %264 = tpu.matmul %262, %263, %cst_107 {dimension_numbers = #tpu.dot_dimension_numbers<[1], [0], [0], [1], [0, 0, 1, 1], [], []>} : vector<4x96xbf16>, vector<96x32xbf16>, vector<4x32xf32> -> vector<4x32xf32>
      %c0_108 = arith.constant 0 : index
      %c0_109 = arith.constant 0 : index
      %265 = vector.load %arg10[%c0_108, %c0_109] : memref<1x32xf32, #tpu.memory_space<vmem>>, vector<1x32xf32>
      %266 = vector.broadcast %265 : vector<1x32xf32> to vector<4x32xf32>
      %267 = arith.addf %264, %266 : vector<4x32xf32>
      %c0_110 = arith.constant 0 : index
      %c0_111 = arith.constant 0 : index
      %268 = vector.load %arg11[%c0_110, %c0_111] : memref<2x32xf32, #tpu.memory_space<vmem>>, vector<2x32xf32>
      %269 = vector.extract_strided_slice %268 {offsets = [0, 0], sizes = [1, 32], strides = [1, 1]} : vector<2x32xf32> to vector<1x32xf32>
      %270 = vector.broadcast %269 : vector<1x32xf32> to vector<4x32xf32>
      %271 = arith.mulf %267, %270 : vector<4x32xf32>
      %272 = vector.extract_strided_slice %268 {offsets = [1, 0], sizes = [1, 32], strides = [1, 1]} : vector<2x32xf32> to vector<1x32xf32>
      %273 = vector.broadcast %272 : vector<1x32xf32> to vector<4x32xf32>
      %274 = arith.addf %271, %273 : vector<4x32xf32>
      %cst_112 = arith.constant 0.000000e+00 : f32
      %275 = vector.broadcast %cst_112 : f32 to vector<4x32xf32>
      %276 = arith.maximumf %274, %275 : vector<4x32xf32>
      %277 = vector.extract_strided_slice %276 {offsets = [0, 0], sizes = [4, 8], strides = [1, 1]} : vector<4x32xf32> to vector<4x8xf32>
      %278 = vector.extract_strided_slice %276 {offsets = [0, 8], sizes = [4, 8], strides = [1, 1]} : vector<4x32xf32> to vector<4x8xf32>
      %279 = vector.extract_strided_slice %276 {offsets = [0, 16], sizes = [4, 8], strides = [1, 1]} : vector<4x32xf32> to vector<4x8xf32>
      %280 = vector.extract_strided_slice %276 {offsets = [0, 24], sizes = [4, 8], strides = [1, 1]} : vector<4x32xf32> to vector<4x8xf32>
      %281 = arith.addf %277, %278 : vector<4x8xf32>
      %282 = arith.subf %277, %278 : vector<4x8xf32>
      %283 = arith.addf %279, %280 : vector<4x8xf32>
      %284 = arith.subf %279, %280 : vector<4x8xf32>
      %285 = arith.subf %282, %284 : vector<4x8xf32>
      %cst_113 = arith.constant 5.000000e-01 : f32
      %286 = vector.broadcast %cst_113 : f32 to vector<4x8xf32>
      %287 = arith.mulf %286, %285 : vector<4x8xf32>
      %c0_114 = arith.constant 0 : index
      %c0_115 = arith.constant 0 : index
      %288 = tpu.strided_load %arg25[%c0_114, %c0_115] {strides = array<i32: 4, 1>} : memref<16x8xf32, #tpu.memory_space<vmem>>, vector<4x8xf32>
      tpu.strided_store %arg25[%c0_114, %c0_115], %287 {strides = array<i32: 4, 1>} : memref<16x8xf32, #tpu.memory_space<vmem>>, vector<4x8xf32>
      %289 = arith.addf %282, %284 : vector<4x8xf32>
      %cst_116 = arith.constant 5.000000e-01 : f32
      %290 = vector.broadcast %cst_116 : f32 to vector<4x8xf32>
      %291 = arith.mulf %290, %289 : vector<4x8xf32>
      %c1_117 = arith.constant 1 : index
      %c0_118 = arith.constant 0 : index
      %292 = tpu.strided_load %arg25[%c1_117, %c0_118] {strides = array<i32: 4, 1>} : memref<16x8xf32, #tpu.memory_space<vmem>>, vector<4x8xf32>
      tpu.strided_store %arg25[%c1_117, %c0_118], %291 {strides = array<i32: 4, 1>} : memref<16x8xf32, #tpu.memory_space<vmem>>, vector<4x8xf32>
      %293 = arith.subf %281, %283 : vector<4x8xf32>
      %cst_119 = arith.constant 5.000000e-01 : f32
      %294 = vector.broadcast %cst_119 : f32 to vector<4x8xf32>
      %295 = arith.mulf %294, %293 : vector<4x8xf32>
      %c2_120 = arith.constant 2 : index
      %c0_121 = arith.constant 0 : index
      %296 = tpu.strided_load %arg25[%c2_120, %c0_121] {strides = array<i32: 4, 1>} : memref<16x8xf32, #tpu.memory_space<vmem>>, vector<4x8xf32>
      tpu.strided_store %arg25[%c2_120, %c0_121], %295 {strides = array<i32: 4, 1>} : memref<16x8xf32, #tpu.memory_space<vmem>>, vector<4x8xf32>
      %297 = arith.addf %281, %283 : vector<4x8xf32>
      %cst_122 = arith.constant 5.000000e-01 : f32
      %298 = vector.broadcast %cst_122 : f32 to vector<4x8xf32>
      %299 = arith.mulf %298, %297 : vector<4x8xf32>
      %c3_123 = arith.constant 3 : index
      %c0_124 = arith.constant 0 : index
      %300 = tpu.strided_load %arg25[%c3_123, %c0_124] {strides = array<i32: 4, 1>} : memref<16x8xf32, #tpu.memory_space<vmem>>, vector<4x8xf32>
      tpu.strided_store %arg25[%c3_123, %c0_124], %299 {strides = array<i32: 4, 1>} : memref<16x8xf32, #tpu.memory_space<vmem>>, vector<4x8xf32>
      %c0_125 = arith.constant 0 : index
      %c0_126 = arith.constant 0 : index
      %301 = vector.load %arg12[%c0_125, %c0_126] : memref<2x32xf32, #tpu.memory_space<vmem>>, vector<2x32xf32>
      %302 = vector.extract_strided_slice %301 {offsets = [0, 0], sizes = [1, 32], strides = [1, 1]} : vector<2x32xf32> to vector<1x32xf32>
      %303 = vector.extract_strided_slice %301 {offsets = [1, 0], sizes = [1, 32], strides = [1, 1]} : vector<2x32xf32> to vector<1x32xf32>
      %cst_127 = arith.constant dense<0.000000e+00> : vector<4xf32>
      %304 = vector.multi_reduction <add>, %276, %cst_127 [1] : vector<4x32xf32> to vector<4xf32>
      %305 = vector.shape_cast %304 : vector<4xf32> to vector<4x1xf32>
      %cst_128 = arith.constant 3.200000e+01 : f32
      %306 = vector.broadcast %cst_128 : f32 to vector<4x1xf32>
      %307 = arith.divf %305, %306 : vector<4x1xf32>
      %308 = vector.broadcast %307 : vector<4x1xf32> to vector<4x32xf32>
      %309 = arith.subf %276, %308 : vector<4x32xf32>
      %310 = arith.mulf %309, %309 : vector<4x32xf32>
      %cst_129 = arith.constant dense<0.000000e+00> : vector<4xf32>
      %311 = vector.multi_reduction <add>, %310, %cst_129 [1] : vector<4x32xf32> to vector<4xf32>
      %312 = vector.shape_cast %311 : vector<4xf32> to vector<4x1xf32>
      %cst_130 = arith.constant 3.200000e+01 : f32
      %313 = vector.broadcast %cst_130 : f32 to vector<4x1xf32>
      %314 = arith.divf %312, %313 : vector<4x1xf32>
      %315 = vector.broadcast %307 : vector<4x1xf32> to vector<4x32xf32>
      %316 = arith.subf %276, %315 : vector<4x32xf32>
      %cst_131 = arith.constant 9.99999974E-6 : f32
      %317 = vector.broadcast %cst_131 : f32 to vector<4x1xf32>
      %318 = arith.addf %314, %317 : vector<4x1xf32>
      %319 = math.rsqrt %318 : vector<4x1xf32>
      %320 = vector.broadcast %319 : vector<4x1xf32> to vector<4x32xf32>
      %321 = arith.mulf %316, %320 : vector<4x32xf32>
      %322 = vector.broadcast %302 : vector<1x32xf32> to vector<4x32xf32>
      %323 = arith.mulf %321, %322 : vector<4x32xf32>
      %324 = vector.broadcast %303 : vector<1x32xf32> to vector<4x32xf32>
      %325 = arith.addf %323, %324 : vector<4x32xf32>
      %326 = arith.truncf %325 : vector<4x32xf32> to vector<4x32xbf16>
      %c0_132 = arith.constant 0 : index
      %c0_133 = arith.constant 0 : index
      %327 = vector.load %arg13[%c0_132, %c0_133] : memref<32x64xbf16, #tpu.memory_space<vmem>>, vector<32x64xbf16>
      %cst_134 = arith.constant dense<0.000000e+00> : vector<4x64xf32>
      %328 = tpu.matmul %326, %327, %cst_134 {dimension_numbers = #tpu.dot_dimension_numbers<[1], [0], [0], [1], [0, 0, 1, 1], [], []>} : vector<4x32xbf16>, vector<32x64xbf16>, vector<4x64xf32> -> vector<4x64xf32>
      %c0_135 = arith.constant 0 : index
      %c0_136 = arith.constant 0 : index
      %329 = vector.load %arg14[%c0_135, %c0_136] : memref<1x64xf32, #tpu.memory_space<vmem>>, vector<1x64xf32>
      %330 = vector.broadcast %329 : vector<1x64xf32> to vector<4x64xf32>
      %331 = arith.addf %328, %330 : vector<4x64xf32>
      %c0_137 = arith.constant 0 : index
      %c0_138 = arith.constant 0 : index
      %332 = vector.load %arg26[%c0_137, %c0_138] : memref<4x64xf32, #tpu.memory_space<vmem>>, vector<4x64xf32>
      tpu.vector_store %arg26[%c0_137, %c0_138], %331 {strides = array<i32>} : memref<4x64xf32, #tpu.memory_space<vmem>>, vector<4x64xf32>,
    } else {
    }
    %c8_i32 = arith.constant 8 : i32
    %3 = arith.muli %arg1, %c8_i32 : i32
    %4 = tpu.assume_multiple %3, 8 : i32
    %c0 = arith.constant 0 : index
    %5 = arith.index_cast %4 : i32 to index
    %c0_1 = arith.constant 0 : index
    %6 = vector.load %arg2[%c0, %5, %c0_1] : memref<1x16x32xf32, #tpu.memory_space<vmem>>, vector<1x8x32xf32>
    %7 = vector.shape_cast %6 : vector<1x8x32xf32> to vector<8x32xf32>
    %c0_2 = arith.constant 0 : index
    %c0_3 = arith.constant 0 : index
    %8 = vector.load %arg3[%c0_2, %c0_3] : memref<2x32xf32, #tpu.memory_space<vmem>>, vector<2x32xf32>
    %9 = vector.extract_strided_slice %8 {offsets = [0, 0], sizes = [1, 32], strides = [1, 1]} : vector<2x32xf32> to vector<1x32xf32>
    %10 = vector.extract_strided_slice %8 {offsets = [1, 0], sizes = [1, 32], strides = [1, 1]} : vector<2x32xf32> to vector<1x32xf32>
    %cst = arith.constant dense<0.000000e+00> : vector<8xf32>
    %11 = vector.multi_reduction <add>, %7, %cst [1] : vector<8x32xf32> to vector<8xf32>
    %12 = vector.shape_cast %11 : vector<8xf32> to vector<8x1xf32>
    %cst_4 = arith.constant 3.200000e+01 : f32
    %13 = vector.broadcast %cst_4 : f32 to vector<8x1xf32>
    %14 = arith.divf %12, %13 : vector<8x1xf32>
    %15 = vector.broadcast %14 : vector<8x1xf32> to vector<8x32xf32>
    %16 = arith.subf %7, %15 : vector<8x32xf32>
    %17 = arith.mulf %16, %16 : vector<8x32xf32>
    %cst_5 = arith.constant dense<0.000000e+00> : vector<8xf32>
    %18 = vector.multi_reduction <add>, %17, %cst_5 [1] : vector<8x32xf32> to vector<8xf32>
    %19 = vector.shape_cast %18 : vector<8xf32> to vector<8x1xf32>
    %cst_6 = arith.constant 3.200000e+01 : f32
    %20 = vector.broadcast %cst_6 : f32 to vector<8x1xf32>
    %21 = arith.divf %19, %20 : vector<8x1xf32>
    %22 = vector.broadcast %14 : vector<8x1xf32> to vector<8x32xf32>
    %23 = arith.subf %7, %22 : vector<8x32xf32>
    %cst_7 = arith.constant 9.99999997E-7 : f32
    %24 = vector.broadcast %cst_7 : f32 to vector<8x1xf32>
    %25 = arith.addf %21, %24 : vector<8x1xf32>
    %26 = math.rsqrt %25 : vector<8x1xf32>
    %27 = vector.broadcast %26 : vector<8x1xf32> to vector<8x32xf32>
    %28 = arith.mulf %23, %27 : vector<8x32xf32>
    %29 = vector.broadcast %9 : vector<1x32xf32> to vector<8x32xf32>
    %30 = arith.mulf %28, %29 : vector<8x32xf32>
    %31 = vector.broadcast %10 : vector<1x32xf32> to vector<8x32xf32>
    %32 = arith.addf %30, %31 : vector<8x32xf32>
    %33 = arith.truncf %32 : vector<8x32xf32> to vector<8x32xbf16>
    %c0_8 = arith.constant 0 : index
    %c0_9 = arith.constant 0 : index
    %34 = vector.load %arg4[%c0_8, %c0_9] : memref<32x32xbf16, #tpu.memory_space<vmem>>, vector<32x32xbf16>
    %cst_10 = arith.constant dense<0.000000e+00> : vector<8x32xf32>
    %35 = tpu.matmul %33, %34, %cst_10 {dimension_numbers = #tpu.dot_dimension_numbers<[1], [0], [0], [1], [0, 0, 1, 1], [], []>} : vector<8x32xbf16>, vector<32x32xbf16>, vector<8x32xf32> -> vector<8x32xf32>
    %c0_11 = arith.constant 0 : index
    %c0_12 = arith.constant 0 : index
    %36 = vector.load %arg5[%c0_11, %c0_12] : memref<1x32xf32, #tpu.memory_space<vmem>>, vector<1x32xf32>
    %37 = vector.broadcast %36 : vector<1x32xf32> to vector<8x32xf32>
    %38 = arith.addf %35, %37 : vector<8x32xf32>
    %c0_13 = arith.constant 0 : index
    %c0_14 = arith.constant 0 : index
    %39 = vector.load %arg26[%c0_13, %c0_14] : memref<4x64xf32, #tpu.memory_space<vmem>>, vector<4x64xf32>
    %40 = vector.extract_strided_slice %39 {offsets = [0, 0], sizes = [4, 32], strides = [1, 1]} : vector<4x64xf32> to vector<4x32xf32>
    %41 = arith.truncf %40 : vector<4x32xf32> to vector<4x32xbf16>
    %42 = vector.extract_strided_slice %39 {offsets = [0, 32], sizes = [4, 32], strides = [1, 1]} : vector<4x64xf32> to vector<4x32xf32>
    %43 = arith.truncf %42 : vector<4x32xf32> to vector<4x32xbf16>
    %44 = vector.extract_strided_slice %38 {offsets = [0, 0], sizes = [8, 8], strides = [1, 1]} : vector<8x32xf32> to vector<8x8xf32>
    %45 = arith.truncf %44 : vector<8x8xf32> to vector<8x8xbf16>
    %46 = vector.extract_strided_slice %41 {offsets = [0, 0], sizes = [4, 8], strides = [1, 1]} : vector<4x32xbf16> to vector<4x8xbf16>
    %cst_15 = arith.constant dense<0.000000e+00> : vector<8x4xf32>
    %47 = tpu.matmul %45, %46, %cst_15 {dimension_numbers = #tpu.dot_dimension_numbers<[1], [1], [0], [0], [0, 0, 1, 0], [], []>} : vector<8x8xbf16>, vector<4x8xbf16>, vector<8x4xf32> -> vector<8x4xf32>
    %cst_16 = arith.constant 0.353553385 : f32
    %48 = vector.broadcast %cst_16 : f32 to vector<8x4xf32>
    %49 = arith.mulf %47, %48 : vector<8x4xf32>
    %cst_17 = arith.constant dense<0xFF800000> : vector<8xf32>
    %50 = vector.multi_reduction <maximumf>, %49, %cst_17 [1] : vector<8x4xf32> to vector<8xf32>
    %51 = vector.shape_cast %50 : vector<8xf32> to vector<8x1xf32>
    %52 = vector.broadcast %51 : vector<8x1xf32> to vector<8x4xf32>
    %53 = arith.subf %49, %52 : vector<8x4xf32>
    %54 = math.exp %53 : vector<8x4xf32>
    %cst_18 = arith.constant dense<0.000000e+00> : vector<8xf32>
    %55 = vector.multi_reduction <add>, %54, %cst_18 [1] : vector<8x4xf32> to vector<8xf32>
    %56 = vector.shape_cast %55 : vector<8xf32> to vector<8x1xf32>
    %57 = tpu.reciprocal %56 {approx = true} : vector<8x1xf32> -> vector<8x1xf32>
    %58 = vector.broadcast %57 : vector<8x1xf32> to vector<8x4xf32>
    %59 = arith.mulf %54, %58 : vector<8x4xf32>
    %60 = arith.truncf %59 : vector<8x4xf32> to vector<8x4xbf16>
    %61 = vector.extract_strided_slice %43 {offsets = [0, 0], sizes = [4, 8], strides = [1, 1]} : vector<4x32xbf16> to vector<4x8xbf16>
    %cst_19 = arith.constant dense<0.000000e+00> : vector<8x8xf32>
    %62 = tpu.matmul %60, %61, %cst_19 {dimension_numbers = #tpu.dot_dimension_numbers<[1], [0], [0], [1], [0, 0, 1, 1], [], []>} : vector<8x4xbf16>, vector<4x8xbf16>, vector<8x8xf32> -> vector<8x8xf32>
    %c0_20 = arith.constant 0 : index
    %c0_21 = arith.constant 0 : index
    %63 = vector.load %arg27[%c0_20, %c0_21] : memref<8x32xf32, #tpu.memory_space<vmem>>, vector<8x8xf32>
    tpu.vector_store %arg27[%c0_20, %c0_21], %62 {strides = array<i32>} : memref<8x32xf32, #tpu.memory_space<vmem>>, vector<8x8xf32>,
    %64 = vector.extract_strided_slice %38 {offsets = [0, 8], sizes = [8, 8], strides = [1, 1]} : vector<8x32xf32> to vector<8x8xf32>
    %65 = arith.truncf %64 : vector<8x8xf32> to vector<8x8xbf16>
    %66 = vector.extract_strided_slice %41 {offsets = [0, 8], sizes = [4, 8], strides = [1, 1]} : vector<4x32xbf16> to vector<4x8xbf16>
    %cst_22 = arith.constant dense<0.000000e+00> : vector<8x4xf32>
    %67 = tpu.matmul %65, %66, %cst_22 {dimension_numbers = #tpu.dot_dimension_numbers<[1], [1], [0], [0], [0, 0, 1, 0], [], []>} : vector<8x8xbf16>, vector<4x8xbf16>, vector<8x4xf32> -> vector<8x4xf32>
    %cst_23 = arith.constant 0.353553385 : f32
    %68 = vector.broadcast %cst_23 : f32 to vector<8x4xf32>
    %69 = arith.mulf %67, %68 : vector<8x4xf32>
    %cst_24 = arith.constant dense<0xFF800000> : vector<8xf32>
    %70 = vector.multi_reduction <maximumf>, %69, %cst_24 [1] : vector<8x4xf32> to vector<8xf32>
    %71 = vector.shape_cast %70 : vector<8xf32> to vector<8x1xf32>
    %72 = vector.broadcast %71 : vector<8x1xf32> to vector<8x4xf32>
    %73 = arith.subf %69, %72 : vector<8x4xf32>
    %74 = math.exp %73 : vector<8x4xf32>
    %cst_25 = arith.constant dense<0.000000e+00> : vector<8xf32>
    %75 = vector.multi_reduction <add>, %74, %cst_25 [1] : vector<8x4xf32> to vector<8xf32>
    %76 = vector.shape_cast %75 : vector<8xf32> to vector<8x1xf32>
    %77 = tpu.reciprocal %76 {approx = true} : vector<8x1xf32> -> vector<8x1xf32>
    %78 = vector.broadcast %77 : vector<8x1xf32> to vector<8x4xf32>
    %79 = arith.mulf %74, %78 : vector<8x4xf32>
    %80 = arith.truncf %79 : vector<8x4xf32> to vector<8x4xbf16>
    %81 = vector.extract_strided_slice %43 {offsets = [0, 8], sizes = [4, 8], strides = [1, 1]} : vector<4x32xbf16> to vector<4x8xbf16>
    %cst_26 = arith.constant dense<0.000000e+00> : vector<8x8xf32>
    %82 = tpu.matmul %80, %81, %cst_26 {dimension_numbers = #tpu.dot_dimension_numbers<[1], [0], [0], [1], [0, 0, 1, 1], [], []>} : vector<8x4xbf16>, vector<4x8xbf16>, vector<8x8xf32> -> vector<8x8xf32>
    %c0_27 = arith.constant 0 : index
    %c8 = arith.constant 8 : index
    %83 = vector.load %arg27[%c0_27, %c8] : memref<8x32xf32, #tpu.memory_space<vmem>>, vector<8x8xf32>
    tpu.vector_store %arg27[%c0_27, %c8], %82 {strides = array<i32>} : memref<8x32xf32, #tpu.memory_space<vmem>>, vector<8x8xf32>,
    %84 = vector.extract_strided_slice %38 {offsets = [0, 16], sizes = [8, 8], strides = [1, 1]} : vector<8x32xf32> to vector<8x8xf32>
    %85 = arith.truncf %84 : vector<8x8xf32> to vector<8x8xbf16>
    %86 = vector.extract_strided_slice %41 {offsets = [0, 16], sizes = [4, 8], strides = [1, 1]} : vector<4x32xbf16> to vector<4x8xbf16>
    %cst_28 = arith.constant dense<0.000000e+00> : vector<8x4xf32>
    %87 = tpu.matmul %85, %86, %cst_28 {dimension_numbers = #tpu.dot_dimension_numbers<[1], [1], [0], [0], [0, 0, 1, 0], [], []>} : vector<8x8xbf16>, vector<4x8xbf16>, vector<8x4xf32> -> vector<8x4xf32>
    %cst_29 = arith.constant 0.353553385 : f32
    %88 = vector.broadcast %cst_29 : f32 to vector<8x4xf32>
    %89 = arith.mulf %87, %88 : vector<8x4xf32>
    %cst_30 = arith.constant dense<0xFF800000> : vector<8xf32>
    %90 = vector.multi_reduction <maximumf>, %89, %cst_30 [1] : vector<8x4xf32> to vector<8xf32>
    %91 = vector.shape_cast %90 : vector<8xf32> to vector<8x1xf32>
    %92 = vector.broadcast %91 : vector<8x1xf32> to vector<8x4xf32>
    %93 = arith.subf %89, %92 : vector<8x4xf32>
    %94 = math.exp %93 : vector<8x4xf32>
    %cst_31 = arith.constant dense<0.000000e+00> : vector<8xf32>
    %95 = vector.multi_reduction <add>, %94, %cst_31 [1] : vector<8x4xf32> to vector<8xf32>
    %96 = vector.shape_cast %95 : vector<8xf32> to vector<8x1xf32>
    %97 = tpu.reciprocal %96 {approx = true} : vector<8x1xf32> -> vector<8x1xf32>
    %98 = vector.broadcast %97 : vector<8x1xf32> to vector<8x4xf32>
    %99 = arith.mulf %94, %98 : vector<8x4xf32>
    %100 = arith.truncf %99 : vector<8x4xf32> to vector<8x4xbf16>
    %101 = vector.extract_strided_slice %43 {offsets = [0, 16], sizes = [4, 8], strides = [1, 1]} : vector<4x32xbf16> to vector<4x8xbf16>
    %cst_32 = arith.constant dense<0.000000e+00> : vector<8x8xf32>
    %102 = tpu.matmul %100, %101, %cst_32 {dimension_numbers = #tpu.dot_dimension_numbers<[1], [0], [0], [1], [0, 0, 1, 1], [], []>} : vector<8x4xbf16>, vector<4x8xbf16>, vector<8x8xf32> -> vector<8x8xf32>
    %c0_33 = arith.constant 0 : index
    %c16 = arith.constant 16 : index
    %103 = vector.load %arg27[%c0_33, %c16] : memref<8x32xf32, #tpu.memory_space<vmem>>, vector<8x8xf32>
    tpu.vector_store %arg27[%c0_33, %c16], %102 {strides = array<i32>} : memref<8x32xf32, #tpu.memory_space<vmem>>, vector<8x8xf32>,
    %104 = vector.extract_strided_slice %38 {offsets = [0, 24], sizes = [8, 8], strides = [1, 1]} : vector<8x32xf32> to vector<8x8xf32>
    %105 = arith.truncf %104 : vector<8x8xf32> to vector<8x8xbf16>
    %106 = vector.extract_strided_slice %41 {offsets = [0, 24], sizes = [4, 8], strides = [1, 1]} : vector<4x32xbf16> to vector<4x8xbf16>
    %cst_34 = arith.constant dense<0.000000e+00> : vector<8x4xf32>
    %107 = tpu.matmul %105, %106, %cst_34 {dimension_numbers = #tpu.dot_dimension_numbers<[1], [1], [0], [0], [0, 0, 1, 0], [], []>} : vector<8x8xbf16>, vector<4x8xbf16>, vector<8x4xf32> -> vector<8x4xf32>
    %cst_35 = arith.constant 0.353553385 : f32
    %108 = vector.broadcast %cst_35 : f32 to vector<8x4xf32>
    %109 = arith.mulf %107, %108 : vector<8x4xf32>
    %cst_36 = arith.constant dense<0xFF800000> : vector<8xf32>
    %110 = vector.multi_reduction <maximumf>, %109, %cst_36 [1] : vector<8x4xf32> to vector<8xf32>
    %111 = vector.shape_cast %110 : vector<8xf32> to vector<8x1xf32>
    %112 = vector.broadcast %111 : vector<8x1xf32> to vector<8x4xf32>
    %113 = arith.subf %109, %112 : vector<8x4xf32>
    %114 = math.exp %113 : vector<8x4xf32>
    %cst_37 = arith.constant dense<0.000000e+00> : vector<8xf32>
    %115 = vector.multi_reduction <add>, %114, %cst_37 [1] : vector<8x4xf32> to vector<8xf32>
    %116 = vector.shape_cast %115 : vector<8xf32> to vector<8x1xf32>
    %117 = tpu.reciprocal %116 {approx = true} : vector<8x1xf32> -> vector<8x1xf32>
    %118 = vector.broadcast %117 : vector<8x1xf32> to vector<8x4xf32>
    %119 = arith.mulf %114, %118 : vector<8x4xf32>
    %120 = arith.truncf %119 : vector<8x4xf32> to vector<8x4xbf16>
    %121 = vector.extract_strided_slice %43 {offsets = [0, 24], sizes = [4, 8], strides = [1, 1]} : vector<4x32xbf16> to vector<4x8xbf16>
    %cst_38 = arith.constant dense<0.000000e+00> : vector<8x8xf32>
    %122 = tpu.matmul %120, %121, %cst_38 {dimension_numbers = #tpu.dot_dimension_numbers<[1], [0], [0], [1], [0, 0, 1, 1], [], []>} : vector<8x4xbf16>, vector<4x8xbf16>, vector<8x8xf32> -> vector<8x8xf32>
    %c0_39 = arith.constant 0 : index
    %c24 = arith.constant 24 : index
    %123 = vector.load %arg27[%c0_39, %c24] : memref<8x32xf32, #tpu.memory_space<vmem>>, vector<8x8xf32>
    tpu.vector_store %arg27[%c0_39, %c24], %122 {strides = array<i32>} : memref<8x32xf32, #tpu.memory_space<vmem>>, vector<8x8xf32>,
    %c0_40 = arith.constant 0 : index
    %c0_41 = arith.constant 0 : index
    %124 = vector.load %arg27[%c0_40, %c0_41] : memref<8x32xf32, #tpu.memory_space<vmem>>, vector<8x32xf32>
    %125 = arith.index_cast %4 : i32 to index
    %c0_42 = arith.constant 0 : index
    %126 = vector.load %arg25[%125, %c0_42] : memref<16x8xf32, #tpu.memory_space<vmem>>, vector<8x8xf32>
    %127 = arith.truncf %124 : vector<8x32xf32> to vector<8x32xbf16>
    %c0_43 = arith.constant 0 : index
    %c0_44 = arith.constant 0 : index
    %128 = vector.load %arg15[%c0_43, %c0_44] : memref<32x32xbf16, #tpu.memory_space<vmem>>, vector<32x32xbf16>
    %cst_45 = arith.constant dense<0.000000e+00> : vector<8x32xf32>
    %129 = tpu.matmul %127, %128, %cst_45 {dimension_numbers = #tpu.dot_dimension_numbers<[1], [0], [0], [1], [0, 0, 1, 1], [], []>} : vector<8x32xbf16>, vector<32x32xbf16>, vector<8x32xf32> -> vector<8x32xf32>
    %130 = arith.truncf %126 : vector<8x8xf32> to vector<8x8xbf16>
    %c0_46 = arith.constant 0 : index
    %c0_47 = arith.constant 0 : index
    %131 = vector.load %arg16[%c0_46, %c0_47] : memref<8x32xbf16, #tpu.memory_space<vmem>>, vector<8x32xbf16>
    %cst_48 = arith.constant dense<0.000000e+00> : vector<8x32xf32>
    %132 = tpu.matmul %130, %131, %cst_48 {dimension_numbers = #tpu.dot_dimension_numbers<[1], [0], [0], [1], [0, 0, 1, 1], [], []>} : vector<8x8xbf16>, vector<8x32xbf16>, vector<8x32xf32> -> vector<8x32xf32>
    %133 = arith.addf %129, %132 : vector<8x32xf32>
    %c0_49 = arith.constant 0 : index
    %c0_50 = arith.constant 0 : index
    %134 = vector.load %arg17[%c0_49, %c0_50] : memref<1x32xf32, #tpu.memory_space<vmem>>, vector<1x32xf32>
    %135 = vector.broadcast %134 : vector<1x32xf32> to vector<8x32xf32>
    %136 = arith.addf %133, %135 : vector<8x32xf32>
    %137 = arith.addf %7, %136 : vector<8x32xf32>
    %c0_51 = arith.constant 0 : index
    %c0_52 = arith.constant 0 : index
    %138 = vector.load %arg18[%c0_51, %c0_52] : memref<2x32xf32, #tpu.memory_space<vmem>>, vector<2x32xf32>
    %139 = vector.extract_strided_slice %138 {offsets = [0, 0], sizes = [1, 32], strides = [1, 1]} : vector<2x32xf32> to vector<1x32xf32>
    %140 = vector.extract_strided_slice %138 {offsets = [1, 0], sizes = [1, 32], strides = [1, 1]} : vector<2x32xf32> to vector<1x32xf32>
    %cst_53 = arith.constant dense<0.000000e+00> : vector<8xf32>
    %141 = vector.multi_reduction <add>, %137, %cst_53 [1] : vector<8x32xf32> to vector<8xf32>
    %142 = vector.shape_cast %141 : vector<8xf32> to vector<8x1xf32>
    %cst_54 = arith.constant 3.200000e+01 : f32
    %143 = vector.broadcast %cst_54 : f32 to vector<8x1xf32>
    %144 = arith.divf %142, %143 : vector<8x1xf32>
    %145 = vector.broadcast %144 : vector<8x1xf32> to vector<8x32xf32>
    %146 = arith.subf %137, %145 : vector<8x32xf32>
    %147 = arith.mulf %146, %146 : vector<8x32xf32>
    %cst_55 = arith.constant dense<0.000000e+00> : vector<8xf32>
    %148 = vector.multi_reduction <add>, %147, %cst_55 [1] : vector<8x32xf32> to vector<8xf32>
    %149 = vector.shape_cast %148 : vector<8xf32> to vector<8x1xf32>
    %cst_56 = arith.constant 3.200000e+01 : f32
    %150 = vector.broadcast %cst_56 : f32 to vector<8x1xf32>
    %151 = arith.divf %149, %150 : vector<8x1xf32>
    %152 = vector.broadcast %144 : vector<8x1xf32> to vector<8x32xf32>
    %153 = arith.subf %137, %152 : vector<8x32xf32>
    %cst_57 = arith.constant 9.99999997E-7 : f32
    %154 = vector.broadcast %cst_57 : f32 to vector<8x1xf32>
    %155 = arith.addf %151, %154 : vector<8x1xf32>
    %156 = math.rsqrt %155 : vector<8x1xf32>
    %157 = vector.broadcast %156 : vector<8x1xf32> to vector<8x32xf32>
    %158 = arith.mulf %153, %157 : vector<8x32xf32>
    %159 = vector.broadcast %139 : vector<1x32xf32> to vector<8x32xf32>
    %160 = arith.mulf %158, %159 : vector<8x32xf32>
    %161 = vector.broadcast %140 : vector<1x32xf32> to vector<8x32xf32>
    %162 = arith.addf %160, %161 : vector<8x32xf32>
    %163 = arith.truncf %162 : vector<8x32xf32> to vector<8x32xbf16>
    %c0_58 = arith.constant 0 : index
    %c0_59 = arith.constant 0 : index
    %164 = vector.load %arg19[%c0_58, %c0_59] : memref<32x128xbf16, #tpu.memory_space<vmem>>, vector<32x128xbf16>
    %cst_60 = arith.constant dense<0.000000e+00> : vector<8x128xf32>
    %165 = tpu.matmul %163, %164, %cst_60 {dimension_numbers = #tpu.dot_dimension_numbers<[1], [0], [0], [1], [0, 0, 1, 1], [], []>} : vector<8x32xbf16>, vector<32x128xbf16>, vector<8x128xf32> -> vector<8x128xf32>
    %c0_61 = arith.constant 0 : index
    %c0_62 = arith.constant 0 : index
    %166 = vector.load %arg20[%c0_61, %c0_62] : memref<1x128xf32, #tpu.memory_space<vmem>>, vector<1x128xf32>
    %167 = vector.broadcast %166 : vector<1x128xf32> to vector<8x128xf32>
    %168 = arith.addf %165, %167 : vector<8x128xf32>
    %cst_63 = arith.constant 5.000000e-01 : f32
    %169 = vector.broadcast %cst_63 : f32 to vector<8x128xf32>
    %170 = arith.mulf %169, %168 : vector<8x128xf32>
    %cst_64 = arith.constant 4.471500e-02 : f32
    %171 = vector.broadcast %cst_64 : f32 to vector<8x128xf32>
    %172 = arith.mulf %171, %168 : vector<8x128xf32>
    %173 = arith.mulf %172, %168 : vector<8x128xf32>
    %174 = arith.mulf %173, %168 : vector<8x128xf32>
    %175 = arith.addf %168, %174 : vector<8x128xf32>
    %cst_65 = arith.constant 0.797884583 : f32
    %176 = vector.broadcast %cst_65 : f32 to vector<8x128xf32>
    %177 = arith.mulf %176, %175 : vector<8x128xf32>
    %178 = math.tanh %177 : vector<8x128xf32>
    %cst_66 = arith.constant 1.000000e+00 : f32
    %179 = vector.broadcast %cst_66 : f32 to vector<8x128xf32>
    %180 = arith.addf %179, %178 : vector<8x128xf32>
    %181 = arith.mulf %170, %180 : vector<8x128xf32>
    %182 = arith.truncf %181 : vector<8x128xf32> to vector<8x128xbf16>
    %c0_67 = arith.constant 0 : index
    %c0_68 = arith.constant 0 : index
    %183 = vector.load %arg21[%c0_67, %c0_68] : memref<128x32xbf16, #tpu.memory_space<vmem>>, vector<128x32xbf16>
    %cst_69 = arith.constant dense<0.000000e+00> : vector<8x32xf32>
    %184 = tpu.matmul %182, %183, %cst_69 {dimension_numbers = #tpu.dot_dimension_numbers<[1], [0], [0], [1], [0, 0, 1, 1], [], []>} : vector<8x128xbf16>, vector<128x32xbf16>, vector<8x32xf32> -> vector<8x32xf32>
    %c0_70 = arith.constant 0 : index
    %c0_71 = arith.constant 0 : index
    %185 = vector.load %arg22[%c0_70, %c0_71] : memref<1x32xf32, #tpu.memory_space<vmem>>, vector<1x32xf32>
    %186 = vector.broadcast %185 : vector<1x32xf32> to vector<8x32xf32>
    %187 = arith.addf %184, %186 : vector<8x32xf32>
    %188 = arith.addf %137, %187 : vector<8x32xf32>
    %c0_72 = arith.constant 0 : index
    %c0_73 = arith.constant 0 : index
    %c0_74 = arith.constant 0 : index
    %189 = vector.load %arg23[%c0_72, %c0_73, %c0_74] : memref<1x8x32xf32, #tpu.memory_space<vmem>>, vector<1x8x32xf32>
    %190 = vector.shape_cast %189 : vector<1x8x32xf32> to vector<8x32xf32>
    %191 = vector.shape_cast %188 : vector<8x32xf32> to vector<1x8x32xf32>
    tpu.vector_store %arg23[%c0_72, %c0_73, %c0_74], %191 {strides = array<i32>} : memref<1x8x32xf32, #tpu.memory_space<vmem>>, vector<1x8x32xf32>,
    return
  }
  func.func @transform_0(%arg0: i32, %arg1: i32) -> (i32, i32, i32) {
    %c0_i32 = arith.constant 0 : i32
    %c0_i32_0 = arith.constant 0 : i32
    %c0_i32_1 = arith.constant 0 : i32
    return %arg0, %c0_i32, %c0_i32_0 : i32, i32, i32
  }
  func.func @transform_1(%arg0: i32, %arg1: i32) -> (i32, i32) {
    %c0_i32 = arith.constant 0 : i32
    %c0_i32_0 = arith.constant 0 : i32
    %c0_i32_1 = arith.constant 0 : i32
    return %c0_i32, %c0_i32_0 : i32, i32
  }
  func.func @transform_2(%arg0: i32, %arg1: i32) -> (i32, i32) {
    %c0_i32 = arith.constant 0 : i32
    %c0_i32_0 = arith.constant 0 : i32
    %c0_i32_1 = arith.constant 0 : i32
    return %c0_i32, %c0_i32_0 : i32, i32
  }
  func.func @transform_3(%arg0: i32, %arg1: i32) -> (i32, i32) {
    %c0_i32 = arith.constant 0 : i32
    %c0_i32_0 = arith.constant 0 : i32
    %c0_i32_1 = arith.constant 0 : i32
    return %c0_i32, %c0_i32_0 : i32, i32
  }
  func.func @transform_4(%arg0: i32, %arg1: i32) -> (i32, i32) {
    %c0_i32 = arith.constant 0 : i32
    %c0_i32_0 = arith.constant 0 : i32
    %c0_i32_1 = arith.constant 0 : i32
    return %c0_i32, %c0_i32_0 : i32, i32
  }
  func.func @transform_5(%arg0: i32, %arg1: i32) -> (i32, i32) {
    %c0_i32 = arith.constant 0 : i32
    %c0_i32_0 = arith.constant 0 : i32
    %c0_i32_1 = arith.constant 0 : i32
    return %c0_i32, %c0_i32_0 : i32, i32
  }
  func.func @transform_6(%arg0: i32, %arg1: i32) -> (i32, i32) {
    %c0_i32 = arith.constant 0 : i32
    %c0_i32_0 = arith.constant 0 : i32
    %c0_i32_1 = arith.constant 0 : i32
    return %c0_i32, %c0_i32_0 : i32, i32
  }
  func.func @transform_7(%arg0: i32, %arg1: i32) -> (i32, i32) {
    %c0_i32 = arith.constant 0 : i32
    %c0_i32_0 = arith.constant 0 : i32
    %c0_i32_1 = arith.constant 0 : i32
    return %c0_i32, %c0_i32_0 : i32, i32
  }
  func.func @transform_8(%arg0: i32, %arg1: i32) -> (i32, i32) {
    %c0_i32 = arith.constant 0 : i32
    %c0_i32_0 = arith.constant 0 : i32
    %c0_i32_1 = arith.constant 0 : i32
    return %c0_i32, %c0_i32_0 : i32, i32
  }
  func.func @transform_9(%arg0: i32, %arg1: i32) -> (i32, i32) {
    %c0_i32 = arith.constant 0 : i32
    %c0_i32_0 = arith.constant 0 : i32
    %c0_i32_1 = arith.constant 0 : i32
    return %c0_i32, %c0_i32_0 : i32, i32
  }
  func.func @transform_10(%arg0: i32, %arg1: i32) -> (i32, i32) {
    %c0_i32 = arith.constant 0 : i32
    %c0_i32_0 = arith.constant 0 : i32
    %c0_i32_1 = arith.constant 0 : i32
    return %c0_i32, %c0_i32_0 : i32, i32
  }
  func.func @transform_11(%arg0: i32, %arg1: i32) -> (i32, i32) {
    %c0_i32 = arith.constant 0 : i32
    %c0_i32_0 = arith.constant 0 : i32
    %c0_i32_1 = arith.constant 0 : i32
    return %c0_i32, %c0_i32_0 : i32, i32
  }
  func.func @transform_12(%arg0: i32, %arg1: i32) -> (i32, i32) {
    %c0_i32 = arith.constant 0 : i32
    %c0_i32_0 = arith.constant 0 : i32
    %c0_i32_1 = arith.constant 0 : i32
    return %c0_i32, %c0_i32_0 : i32, i32
  }
  func.func @transform_13(%arg0: i32, %arg1: i32) -> (i32, i32) {
    %c0_i32 = arith.constant 0 : i32
    %c0_i32_0 = arith.constant 0 : i32
    %c0_i32_1 = arith.constant 0 : i32
    return %c0_i32, %c0_i32_0 : i32, i32
  }
  func.func @transform_14(%arg0: i32, %arg1: i32) -> (i32, i32) {
    %c0_i32 = arith.constant 0 : i32
    %c0_i32_0 = arith.constant 0 : i32
    %c0_i32_1 = arith.constant 0 : i32
    return %c0_i32, %c0_i32_0 : i32, i32
  }
  func.func @transform_15(%arg0: i32, %arg1: i32) -> (i32, i32) {
    %c0_i32 = arith.constant 0 : i32
    %c0_i32_0 = arith.constant 0 : i32
    %c0_i32_1 = arith.constant 0 : i32
    return %c0_i32, %c0_i32_0 : i32, i32
  }
  func.func @transform_16(%arg0: i32, %arg1: i32) -> (i32, i32) {
    %c0_i32 = arith.constant 0 : i32
    %c0_i32_0 = arith.constant 0 : i32
    %c0_i32_1 = arith.constant 0 : i32
    return %c0_i32, %c0_i32_0 : i32, i32
  }
  func.func @transform_17(%arg0: i32, %arg1: i32) -> (i32, i32) {
    %c0_i32 = arith.constant 0 : i32
    %c0_i32_0 = arith.constant 0 : i32
    %c0_i32_1 = arith.constant 0 : i32
    return %c0_i32, %c0_i32_0 : i32, i32
  }
  func.func @transform_18(%arg0: i32, %arg1: i32) -> (i32, i32) {
    %c0_i32 = arith.constant 0 : i32
    %c0_i32_0 = arith.constant 0 : i32
    %c0_i32_1 = arith.constant 0 : i32
    return %c0_i32, %c0_i32_0 : i32, i32
  }
  func.func @transform_19(%arg0: i32, %arg1: i32) -> (i32, i32) {
    %c0_i32 = arith.constant 0 : i32
    %c0_i32_0 = arith.constant 0 : i32
    %c0_i32_1 = arith.constant 0 : i32
    return %c0_i32, %c0_i32_0 : i32, i32
  }
  func.func @transform_20(%arg0: i32, %arg1: i32) -> (i32, i32) {
    %c0_i32 = arith.constant 0 : i32
    %c0_i32_0 = arith.constant 0 : i32
    %c0_i32_1 = arith.constant 0 : i32
    return %c0_i32, %c0_i32_0 : i32, i32
  }
  func.func @transform_21(%arg0: i32, %arg1: i32) -> (i32, i32, i32) {
    %c0_i32 = arith.constant 0 : i32
    %c0_i32_0 = arith.constant 0 : i32
    return %arg0, %arg1, %c0_i32 : i32, i32, i32
  }
}

</mosaic_0001>

<llo_original>
// kernel: tpu_custom_call.1
$region0: #{tpu_custom_call.1}
  #allocation0 [shape = 'u32[]', space=smem, size = 0x4, offset = 0x4, fixed_abs, tag = 'smem constant byte address 0x4 - core index']
  #allocation1 [shape = 'u32[72,128]{1,0:T(1,128)}', space=vmem, size = 0x9000, scoped, tag = 'internal scratch']
  #allocation2 [shape = 'f32[16,8]{1,0:T(8,128)}', space=vmem, size = 0x2000, scoped, tag = 'scratch operand']
  #allocation3 [shape = 'f32[16,8]{1,0:T(8,128)}', space=vmem, size = 0x2000, scoped, tag = 'scratch operand']
  #allocation4 [shape = 'f32[4,64]{1,0:T(4,128)}', space=vmem, size = 0x800, scoped, tag = 'scratch operand']
  #allocation5 [shape = 'f32[8,32]{1,0:T(8,128)}', space=vmem, size = 0x1000, scoped, tag = 'scratch operand']
  %s0 = inlined_call_operand.vmem [shape: f32[2,16,32], index: 0, kind: input, shape index: {}]
  %s1 = inlined_call_operand.vmem [shape: f32[2,32], index: 1, kind: input, shape index: {}]
  %s2 = inlined_call_operand.vmem [shape: bf16[32,32], index: 2, kind: input, shape index: {}]
  %s3 = inlined_call_operand.vmem [shape: f32[1,32], index: 3, kind: input, shape index: {}]
  %s4 = inlined_call_operand.vmem [shape: bf16[32,8], index: 4, kind: input, shape index: {}]
  %s5 = inlined_call_operand.vmem [shape: f32[1,8], index: 5, kind: input, shape index: {}]
  %s6 = inlined_call_operand.vmem [shape: f32[2,8], index: 6, kind: input, shape index: {}]
  %s7 = inlined_call_operand.vmem [shape: bf16[96,32], index: 7, kind: input, shape index: {}]
  %s8 = inlined_call_operand.vmem [shape: f32[1,32], index: 8, kind: input, shape index: {}]
  %s9 = inlined_call_operand.vmem [shape: f32[2,32], index: 9, kind: input, shape index: {}]
  %s10 = inlined_call_operand.vmem [shape: f32[2,32], index: 10, kind: input, shape index: {}]
  %s11 = inlined_call_operand.vmem [shape: bf16[32,64], index: 11, kind: input, shape index: {}]
  %s12 = inlined_call_operand.vmem [shape: f32[1,64], index: 12, kind: input, shape index: {}]
  %s13 = inlined_call_operand.vmem [shape: bf16[32,32], index: 13, kind: input, shape index: {}]
  %s14 = inlined_call_operand.vmem [shape: bf16[8,32], index: 14, kind: input, shape index: {}]
  %s15 = inlined_call_operand.vmem [shape: f32[1,32], index: 15, kind: input, shape index: {}]
  %s16 = inlined_call_operand.vmem [shape: f32[2,32], index: 16, kind: input, shape index: {}]
  %s17 = inlined_call_operand.vmem [shape: bf16[32,128], index: 17, kind: input, shape index: {}]
  %s18 = inlined_call_operand.vmem [shape: f32[1,128], index: 18, kind: input, shape index: {}]
  %s19 = inlined_call_operand.vmem [shape: bf16[128,32], index: 19, kind: input, shape index: {}]
  %s20 = inlined_call_operand.vmem [shape: f32[1,32], index: 20, kind: input, shape index: {}]
  %s21 = inlined_call_operand.hbm [shape: f32[2,16,32], index: 21, kind: output, shape index: {}]
  %s22 = sld [smem:[#allocation0]]
  $region121: #{tpu_custom_call.1} parent=0
    _
  %s24 = ssub.s32 1, %s22
  %s25 = scalar_select 0, %s24, %s22
  $region1: #{tpu_custom_call.1} parent=0
    #allocation6 [shape = 'u8[8192]{0}', space=vmem, size = 0x2000, scoped, tag = 'output window, operand 0']
    #allocation7 [shape = 's32[2]{0}', space=sflag, size = 0x8, scoped, tag = 'scoped memory for tpu_custom_call.1']
    %26 = vsyncpa [#allocation7], 0
    %s27 = scalar_lea.sflag [#allocation7], 1
    %28 = vsyncpa %s27, 0
    loop: start=0, step=1, limit=6
    $region2: #{tpu_custom_call.1} parent=1 // loop_pre_header
      _
    $region3: #{tpu_custom_call.1} parent=1 // loop_header
      %s30 = sphi 0, %s34
      %p31 = scmp.ge.s32.totalorder %s30, 6
      %s37 = sphi 0, %s49
      %s38 = sphi 0, %s45
      %s39 = sphi 0, %s37
      %s40 = sphi 0, %s38
      %s41 = sphi 0, %s39
      %s42 = sphi 0, %s40
      %s52 = sphi 0, %s54
      %s55 = sphi 0, %s52
      %s56 = sphi 0, %s55
      %s72 = sphi 0, %s56
      %s76 = sphi 0, %s76
      %s78 = sphi 0, %s76
      %s79 = sphi 0, %s78
      %s93 = sphi 0, %s79
      %s97 = sphi 0, %s97
      %s99 = sphi 0, %s97
      %s100 = sphi 0, %s99
      %s114 = sphi 0, %s100
      %s118 = sphi 0, %s118
      %s120 = sphi 0, %s118
      %s121 = sphi 0, %s120
      %s135 = sphi 0, %s121
      %s139 = sphi 0, %s139
      %s141 = sphi 0, %s139
      %s142 = sphi 0, %s141
      %s156 = sphi 0, %s142
      %s160 = sphi 0, %s160
      %s162 = sphi 0, %s160
      %s163 = sphi 0, %s162
      %s177 = sphi 0, %s163
      %s181 = sphi 0, %s181
      %s183 = sphi 0, %s181
      %s184 = sphi 0, %s183
      %s198 = sphi 0, %s184
      %s202 = sphi 0, %s202
      %s204 = sphi 0, %s202
      %s205 = sphi 0, %s204
      %s219 = sphi 0, %s205
      %s223 = sphi 0, %s223
      %s225 = sphi 0, %s223
      %s226 = sphi 0, %s225
      %s240 = sphi 0, %s226
      %s244 = sphi 0, %s244
      %s246 = sphi 0, %s244
      %s247 = sphi 0, %s246
      %s261 = sphi 0, %s247
      %s265 = sphi 0, %s265
      %s267 = sphi 0, %s265
      %s268 = sphi 0, %s267
      %s282 = sphi 0, %s268
      %s286 = sphi 0, %s286
      %s288 = sphi 0, %s286
      %s289 = sphi 0, %s288
      %s303 = sphi 0, %s289
      %s307 = sphi 0, %s307
      %s309 = sphi 0, %s307
      %s310 = sphi 0, %s309
      %s324 = sphi 0, %s310
      %s328 = sphi 0, %s328
      %s330 = sphi 0, %s328
      %s331 = sphi 0, %s330
      %s345 = sphi 0, %s331
      %s349 = sphi 0, %s349
      %s351 = sphi 0, %s349
      %s352 = sphi 0, %s351
      %s366 = sphi 0, %s352
      %s370 = sphi 0, %s370
      %s372 = sphi 0, %s370
      %s373 = sphi 0, %s372
      %s387 = sphi 0, %s373
      %s391 = sphi 0, %s391
      %s393 = sphi 0, %s391
      %s394 = sphi 0, %s393
      %s408 = sphi 0, %s394
      %s412 = sphi 0, %s412
      %s414 = sphi 0, %s412
      %s415 = sphi 0, %s414
      %s429 = sphi 0, %s415
      %s433 = sphi 0, %s433
      %s435 = sphi 0, %s433
      %s436 = sphi 0, %s435
      %s450 = sphi 0, %s436
      %s454 = sphi 0, %s454
      %s456 = sphi 0, %s454
      %s457 = sphi 0, %s456
      %s471 = sphi 0, %s457
      %s475 = sphi 0, %s475
      %s477 = sphi 0, %s475
      %s478 = sphi 0, %s477
      %s492 = sphi 0, %s478
      %s500 = sphi 0, %s502
      %s503 = sphi 0, %s500
      %s504 = sphi 0, %s503
      %s520 = sphi 0, %s504
    $region4: #{tpu_custom_call.1} parent=1 // loop_header_branch
      %33 = sbr.rel (%p31) target = $region8
    $region5: #{tpu_custom_call.1} parent=1 // loop_body
      %s35 = ssub.s32 %s30, 1
      %s36 = ssub.s32 %s30, 2
      %s43 = sadd.s32 1, %s38
      %p44 = scmp.ge.s32.totalorder %s43, 2
      %s45 = scalar_select %p44, 0, %s43
      %s46 = sadd.s32 1, %s37
      %s47 = scalar_select %p44, %s46, %s37
      %p48 = scmp.ge.s32.totalorder %s47, 2
      %s49 = scalar_select %p48, 0, %s47
      %s50 = ssub.s32 %s37, %s49
      %p51 = scmp.eq.s32.totalorder %s50, 0
      %s53 = sadd.s32 %s52, 1
      %s54 = scalar_select %p51, %s52, %s53
      %p57 = pneg %p51
      %p58 = scmp.eq.s32.totalorder %s30, 3
      %p59 = por %p57, %p58
      %p60 = scmp.ne.s32.totalorder %s52, %s55
      %p61 = scmp.eq.s32.totalorder %s30, 0
      %p62 = por %p60, %p61
      %p63 = scmp.ne.s32.totalorder %s52, %s55
      %p64 = scmp.eq.s32.totalorder %s35, 3
      %p65 = por %p63, %p64
      %p66 = scmp.ne.s32.totalorder %s55, %s56
      %p67 = scmp.eq.s32.totalorder %s35, 0
      %p68 = por %p66, %p67
      %p69 = scmp.ne.s32.totalorder %s55, %s56
      %p70 = scmp.eq.s32.totalorder %s36, 3
      %p71 = por %p69, %p70
      %p73 = scmp.ne.s32.totalorder %s56, %s72
      %p74 = scmp.eq.s32.totalorder %s36, 0
      %p75 = por %p73, %p74
      %s77 = sadd.s32 %s76, 1
      %p80 = scmp.eq.s32.totalorder %s30, 3
      %p81 = scmp.ne.s32.totalorder %s76, %s78
      %p82 = scmp.eq.s32.totalorder %s30, 0
      %p83 = por %p81, %p82
      %p84 = scmp.ne.s32.totalorder %s76, %s78
      %p85 = scmp.eq.s32.totalorder %s35, 3
      %p86 = por %p84, %p85
      %p87 = scmp.ne.s32.totalorder %s78, %s79
      %p88 = scmp.eq.s32.totalorder %s35, 0
      %p89 = por %p87, %p88
      %p90 = scmp.ne.s32.totalorder %s78, %s79
      %p91 = scmp.eq.s32.totalorder %s36, 3
      %p92 = por %p90, %p91
      %p94 = scmp.ne.s32.totalorder %s79, %s93
      %p95 = scmp.eq.s32.totalorder %s36, 0
      %p96 = por %p94, %p95
      %s98 = sadd.s32 %s97, 1
      %p101 = scmp.eq.s32.totalorder %s30, 3
      %p102 = scmp.ne.s32.totalorder %s97, %s99
      %p103 = scmp.eq.s32.totalorder %s30, 0
      %p104 = por %p102, %p103
      %p105 = scmp.ne.s32.totalorder %s97, %s99
      %p106 = scmp.eq.s32.totalorder %s35, 3
      %p107 = por %p105, %p106
      %p108 = scmp.ne.s32.totalorder %s99, %s100
      %p109 = scmp.eq.s32.totalorder %s35, 0
      %p110 = por %p108, %p109
      %p111 = scmp.ne.s32.totalorder %s99, %s100
      %p112 = scmp.eq.s32.totalorder %s36, 3
      %p113 = por %p111, %p112
      %p115 = scmp.ne.s32.totalorder %s100, %s114
      %p116 = scmp.eq.s32.totalorder %s36, 0
      %p117 = por %p115, %p116
      %s119 = sadd.s32 %s118, 1
      %p122 = scmp.eq.s32.totalorder %s30, 3
      %p123 = scmp.ne.s32.totalorder %s118, %s120
      %p124 = scmp.eq.s32.totalorder %s30, 0
      %p125 = por %p123, %p124
      %p126 = scmp.ne.s32.totalorder %s118, %s120
      %p127 = scmp.eq.s32.totalorder %s35, 3
      %p128 = por %p126, %p127
      %p129 = scmp.ne.s32.totalorder %s120, %s121
      %p130 = scmp.eq.s32.totalorder %s35, 0
      %p131 = por %p129, %p130
      %p132 = scmp.ne.s32.totalorder %s120, %s121
      %p133 = scmp.eq.s32.totalorder %s36, 3
      %p134 = por %p132, %p133
      %p136 = scmp.ne.s32.totalorder %s121, %s135
      %p137 = scmp.eq.s32.totalorder %s36, 0
      %p138 = por %p136, %p137
      %s140 = sadd.s32 %s139, 1
      %p143 = scmp.eq.s32.totalorder %s30, 3
      %p144 = scmp.ne.s32.totalorder %s139, %s141
      %p145 = scmp.eq.s32.totalorder %s30, 0
      %p146 = por %p144, %p145
      %p147 = scmp.ne.s32.totalorder %s139, %s141
      %p148 = scmp.eq.s32.totalorder %s35, 3
      %p149 = por %p147, %p148
      %p150 = scmp.ne.s32.totalorder %s141, %s142
      %p151 = scmp.eq.s32.totalorder %s35, 0
      %p152 = por %p150, %p151
      %p153 = scmp.ne.s32.totalorder %s141, %s142
      %p154 = scmp.eq.s32.totalorder %s36, 3
      %p155 = por %p153, %p154
      %p157 = scmp.ne.s32.totalorder %s142, %s156
      %p158 = scmp.eq.s32.totalorder %s36, 0
      %p159 = por %p157, %p158
      %s161 = sadd.s32 %s160, 1
      %p164 = scmp.eq.s32.totalorder %s30, 3
      %p165 = scmp.ne.s32.totalorder %s160, %s162
      %p166 = scmp.eq.s32.totalorder %s30, 0
      %p167 = por %p165, %p166
      %p168 = scmp.ne.s32.totalorder %s160, %s162
      %p169 = scmp.eq.s32.totalorder %s35, 3
      %p170 = por %p168, %p169
      %p171 = scmp.ne.s32.totalorder %s162, %s163
      %p172 = scmp.eq.s32.totalorder %s35, 0
      %p173 = por %p171, %p172
      %p174 = scmp.ne.s32.totalorder %s162, %s163
      %p175 = scmp.eq.s32.totalorder %s36, 3
      %p176 = por %p174, %p175
      %p178 = scmp.ne.s32.totalorder %s163, %s177
      %p179 = scmp.eq.s32.totalorder %s36, 0
      %p180 = por %p178, %p179
      %s182 = sadd.s32 %s181, 1
      %p185 = scmp.eq.s32.totalorder %s30, 3
      %p186 = scmp.ne.s32.totalorder %s181, %s183
      %p187 = scmp.eq.s32.totalorder %s30, 0
      %p188 = por %p186, %p187
      %p189 = scmp.ne.s32.totalorder %s181, %s183
      %p190 = scmp.eq.s32.totalorder %s35, 3
      %p191 = por %p189, %p190
      %p192 = scmp.ne.s32.totalorder %s183, %s184
      %p193 = scmp.eq.s32.totalorder %s35, 0
      %p194 = por %p192, %p193
      %p195 = scmp.ne.s32.totalorder %s183, %s184
      %p196 = scmp.eq.s32.totalorder %s36, 3
      %p197 = por %p195, %p196
      %p199 = scmp.ne.s32.totalorder %s184, %s198
      %p200 = scmp.eq.s32.totalorder %s36, 0
      %p201 = por %p199, %p200
      %s203 = sadd.s32 %s202, 1
      %p206 = scmp.eq.s32.totalorder %s30, 3
      %p207 = scmp.ne.s32.totalorder %s202, %s204
      %p208 = scmp.eq.s32.totalorder %s30, 0
      %p209 = por %p207, %p208
      %p210 = scmp.ne.s32.totalorder %s202, %s204
      %p211 = scmp.eq.s32.totalorder %s35, 3
      %p212 = por %p210, %p211
      %p213 = scmp.ne.s32.totalorder %s204, %s205
      %p214 = scmp.eq.s32.totalorder %s35, 0
      %p215 = por %p213, %p214
      %p216 = scmp.ne.s32.totalorder %s204, %s205
      %p217 = scmp.eq.s32.totalorder %s36, 3
      %p218 = por %p216, %p217
      %p220 = scmp.ne.s32.totalorder %s205, %s219
      %p221 = scmp.eq.s32.totalorder %s36, 0
      %p222 = por %p220, %p221
      %s224 = sadd.s32 %s223, 1
      %p227 = scmp.eq.s32.totalorder %s30, 3
      %p228 = scmp.ne.s32.totalorder %s223, %s225
      %p229 = scmp.eq.s32.totalorder %s30, 0
      %p230 = por %p228, %p229
      %p231 = scmp.ne.s32.totalorder %s223, %s225
      %p232 = scmp.eq.s32.totalorder %s35, 3
      %p233 = por %p231, %p232
      %p234 = scmp.ne.s32.totalorder %s225, %s226
      %p235 = scmp.eq.s32.totalorder %s35, 0
      %p236 = por %p234, %p235
      %p237 = scmp.ne.s32.totalorder %s225, %s226
      %p238 = scmp.eq.s32.totalorder %s36, 3
      %p239 = por %p237, %p238
      %p241 = scmp.ne.s32.totalorder %s226, %s240
      %p242 = scmp.eq.s32.totalorder %s36, 0
      %p243 = por %p241, %p242
      %s245 = sadd.s32 %s244, 1
      %p248 = scmp.eq.s32.totalorder %s30, 3
      %p249 = scmp.ne.s32.totalorder %s244, %s246
      %p250 = scmp.eq.s32.totalorder %s30, 0
      %p251 = por %p249, %p250
      %p252 = scmp.ne.s32.totalorder %s244, %s246
      %p253 = scmp.eq.s32.totalorder %s35, 3
      %p254 = por %p252, %p253
      %p255 = scmp.ne.s32.totalorder %s246, %s247
      %p256 = scmp.eq.s32.totalorder %s35, 0
      %p257 = por %p255, %p256
      %p258 = scmp.ne.s32.totalorder %s246, %s247
      %p259 = scmp.eq.s32.totalorder %s36, 3
      %p260 = por %p258, %p259
      %p262 = scmp.ne.s32.totalorder %s247, %s261
      %p263 = scmp.eq.s32.totalorder %s36, 0
      %p264 = por %p262, %p263
      %s266 = sadd.s32 %s265, 1
      %p269 = scmp.eq.s32.totalorder %s30, 3
      %p270 = scmp.ne.s32.totalorder %s265, %s267
      %p271 = scmp.eq.s32.totalorder %s30, 0
      %p272 = por %p270, %p271
      %p273 = scmp.ne.s32.totalorder %s265, %s267
      %p274 = scmp.eq.s32.totalorder %s35, 3
      %p275 = por %p273, %p274
      %p276 = scmp.ne.s32.totalorder %s267, %s268
      %p277 = scmp.eq.s32.totalorder %s35, 0
      %p278 = por %p276, %p277
      %p279 = scmp.ne.s32.totalorder %s267, %s268
      %p280 = scmp.eq.s32.totalorder %s36, 3
      %p281 = por %p279, %p280
      %p283 = scmp.ne.s32.totalorder %s268, %s282
      %p284 = scmp.eq.s32.totalorder %s36, 0
      %p285 = por %p283, %p284
      %s287 = sadd.s32 %s286, 1
      %p290 = scmp.eq.s32.totalorder %s30, 3
      %p291 = scmp.ne.s32.totalorder %s286, %s288
      %p292 = scmp.eq.s32.totalorder %s30, 0
      %p293 = por %p291, %p292
      %p294 = scmp.ne.s32.totalorder %s286, %s288
      %p295 = scmp.eq.s32.totalorder %s35, 3
      %p296 = por %p294, %p295
      %p297 = scmp.ne.s32.totalorder %s288, %s289
      %p298 = scmp.eq.s32.totalorder %s35, 0
      %p299 = por %p297, %p298
      %p300 = scmp.ne.s32.totalorder %s288, %s289
      %p301 = scmp.eq.s32.totalorder %s36, 3
      %p302 = por %p300, %p301
      %p304 = scmp.ne.s32.totalorder %s289, %s303
      %p305 = scmp.eq.s32.totalorder %s36, 0
      %p306 = por %p304, %p305
      %s308 = sadd.s32 %s307, 1
      %p311 = scmp.eq.s32.totalorder %s30, 3
      %p312 = scmp.ne.s32.totalorder %s307, %s309
      %p313 = scmp.eq.s32.totalorder %s30, 0
      %p314 = por %p312, %p313
      %p315 = scmp.ne.s32.totalorder %s307, %s309
      %p316 = scmp.eq.s32.totalorder %s35, 3
      %p317 = por %p315, %p316
      %p318 = scmp.ne.s32.totalorder %s309, %s310
      %p319 = scmp.eq.s32.totalorder %s35, 0
      %p320 = por %p318, %p319
      %p321 = scmp.ne.s32.totalorder %s309, %s310
      %p322 = scmp.eq.s32.totalorder %s36, 3
      %p323 = por %p321, %p322
      %p325 = scmp.ne.s32.totalorder %s310, %s324
      %p326 = scmp.eq.s32.totalorder %s36, 0
      %p327 = por %p325, %p326
      %s329 = sadd.s32 %s328, 1
      %p332 = scmp.eq.s32.totalorder %s30, 3
      %p333 = scmp.ne.s32.totalorder %s328, %s330
      %p334 = scmp.eq.s32.totalorder %s30, 0
      %p335 = por %p333, %p334
      %p336 = scmp.ne.s32.totalorder %s328, %s330
      %p337 = scmp.eq.s32.totalorder %s35, 3
      %p338 = por %p336, %p337
      %p339 = scmp.ne.s32.totalorder %s330, %s331
      %p340 = scmp.eq.s32.totalorder %s35, 0
      %p341 = por %p339, %p340
      %p342 = scmp.ne.s32.totalorder %s330, %s331
      %p343 = scmp.eq.s32.totalorder %s36, 3
      %p344 = por %p342, %p343
      %p346 = scmp.ne.s32.totalorder %s331, %s345
      %p347 = scmp.eq.s32.totalorder %s36, 0
      %p348 = por %p346, %p347
      %s350 = sadd.s32 %s349, 1
      %p353 = scmp.eq.s32.totalorder %s30, 3
      %p354 = scmp.ne.s32.totalorder %s349, %s351
      %p355 = scmp.eq.s32.totalorder %s30, 0
      %p356 = por %p354, %p355
      %p357 = scmp.ne.s32.totalorder %s349, %s351
      %p358 = scmp.eq.s32.totalorder %s35, 3
      %p359 = por %p357, %p358
      %p360 = scmp.ne.s32.totalorder %s351, %s352
      %p361 = scmp.eq.s32.totalorder %s35, 0
      %p362 = por %p360, %p361
      %p363 = scmp.ne.s32.totalorder %s351, %s352
      %p364 = scmp.eq.s32.totalorder %s36, 3
      %p365 = por %p363, %p364
      %p367 = scmp.ne.s32.totalorder %s352, %s366
      %p368 = scmp.eq.s32.totalorder %s36, 0
      %p369 = por %p367, %p368
      %s371 = sadd.s32 %s370, 1
      %p374 = scmp.eq.s32.totalorder %s30, 3
      %p375 = scmp.ne.s32.totalorder %s370, %s372
      %p376 = scmp.eq.s32.totalorder %s30, 0
      %p377 = por %p375, %p376
      %p378 = scmp.ne.s32.totalorder %s370, %s372
      %p379 = scmp.eq.s32.totalorder %s35, 3
      %p380 = por %p378, %p379
      %p381 = scmp.ne.s32.totalorder %s372, %s373
      %p382 = scmp.eq.s32.totalorder %s35, 0
      %p383 = por %p381, %p382
      %p384 = scmp.ne.s32.totalorder %s372, %s373
      %p385 = scmp.eq.s32.totalorder %s36, 3
      %p386 = por %p384, %p385
      %p388 = scmp.ne.s32.totalorder %s373, %s387
      %p389 = scmp.eq.s32.totalorder %s36, 0
      %p390 = por %p388, %p389
      %s392 = sadd.s32 %s391, 1
      %p395 = scmp.eq.s32.totalorder %s30, 3
      %p396 = scmp.ne.s32.totalorder %s391, %s393
      %p397 = scmp.eq.s32.totalorder %s30, 0
      %p398 = por %p396, %p397
      %p399 = scmp.ne.s32.totalorder %s391, %s393
      %p400 = scmp.eq.s32.totalorder %s35, 3
      %p401 = por %p399, %p400
      %p402 = scmp.ne.s32.totalorder %s393, %s394
      %p403 = scmp.eq.s32.totalorder %s35, 0
      %p404 = por %p402, %p403
      %p405 = scmp.ne.s32.totalorder %s393, %s394
      %p406 = scmp.eq.s32.totalorder %s36, 3
      %p407 = por %p405, %p406
      %p409 = scmp.ne.s32.totalorder %s394, %s408
      %p410 = scmp.eq.s32.totalorder %s36, 0
      %p411 = por %p409, %p410
      %s413 = sadd.s32 %s412, 1
      %p416 = scmp.eq.s32.totalorder %s30, 3
      %p417 = scmp.ne.s32.totalorder %s412, %s414
      %p418 = scmp.eq.s32.totalorder %s30, 0
      %p419 = por %p417, %p418
      %p420 = scmp.ne.s32.totalorder %s412, %s414
      %p421 = scmp.eq.s32.totalorder %s35, 3
      %p422 = por %p420, %p421
      %p423 = scmp.ne.s32.totalorder %s414, %s415
      %p424 = scmp.eq.s32.totalorder %s35, 0
      %p425 = por %p423, %p424
      %p426 = scmp.ne.s32.totalorder %s414, %s415
      %p427 = scmp.eq.s32.totalorder %s36, 3
      %p428 = por %p426, %p427
      %p430 = scmp.ne.s32.totalorder %s415, %s429
      %p431 = scmp.eq.s32.totalorder %s36, 0
      %p432 = por %p430, %p431
      %s434 = sadd.s32 %s433, 1
      %p437 = scmp.eq.s32.totalorder %s30, 3
      %p438 = scmp.ne.s32.totalorder %s433, %s435
      %p439 = scmp.eq.s32.totalorder %s30, 0
      %p440 = por %p438, %p439
      %p441 = scmp.ne.s32.totalorder %s433, %s435
      %p442 = scmp.eq.s32.totalorder %s35, 3
      %p443 = por %p441, %p442
      %p444 = scmp.ne.s32.totalorder %s435, %s436
      %p445 = scmp.eq.s32.totalorder %s35, 0
      %p446 = por %p444, %p445
      %p447 = scmp.ne.s32.totalorder %s435, %s436
      %p448 = scmp.eq.s32.totalorder %s36, 3
      %p449 = por %p447, %p448
      %p451 = scmp.ne.s32.totalorder %s436, %s450
      %p452 = scmp.eq.s32.totalorder %s36, 0
      %p453 = por %p451, %p452
      %s455 = sadd.s32 %s454, 1
      %p458 = scmp.eq.s32.totalorder %s30, 3
      %p459 = scmp.ne.s32.totalorder %s454, %s456
      %p460 = scmp.eq.s32.totalorder %s30, 0
      %p461 = por %p459, %p460
      %p462 = scmp.ne.s32.totalorder %s454, %s456
      %p463 = scmp.eq.s32.totalorder %s35, 3
      %p464 = por %p462, %p463
      %p465 = scmp.ne.s32.totalorder %s456, %s457
      %p466 = scmp.eq.s32.totalorder %s35, 0
      %p467 = por %p465, %p466
      %p468 = scmp.ne.s32.totalorder %s456, %s457
      %p469 = scmp.eq.s32.totalorder %s36, 3
      %p470 = por %p468, %p469
      %p472 = scmp.ne.s32.totalorder %s457, %s471
      %p473 = scmp.eq.s32.totalorder %s36, 0
      %p474 = por %p472, %p473
      %s476 = sadd.s32 %s475, 1
      %p479 = scmp.eq.s32.totalorder %s30, 3
      %p480 = scmp.ne.s32.totalorder %s475, %s477
      %p481 = scmp.eq.s32.totalorder %s30, 0
      %p482 = por %p480, %p481
      %p483 = scmp.ne.s32.totalorder %s475, %s477
      %p484 = scmp.eq.s32.totalorder %s35, 3
      %p485 = por %p483, %p484
      %p486 = scmp.ne.s32.totalorder %s477, %s478
      %p487 = scmp.eq.s32.totalorder %s35, 0
      %p488 = por %p486, %p487
      %p489 = scmp.ne.s32.totalorder %s477, %s478
      %p490 = scmp.eq.s32.totalorder %s36, 3
      %p491 = por %p489, %p490
      %p493 = scmp.ne.s32.totalorder %s478, %s492
      %p494 = scmp.eq.s32.totalorder %s36, 0
      %p495 = por %p493, %p494
      %s496 = ssub.s32 %s37, %s49
      %s497 = ssub.s32 %s38, %s45
      %s498 = sor.u32 %s496, %s497
      %p499 = scmp.eq.s32.totalorder %s498, 0
      %s501 = sadd.s32 %s500, 1
      %s502 = scalar_select %p499, %s500, %s501
      %p505 = pneg %p499
      %p506 = scmp.eq.s32.totalorder %s30, 3
      %p507 = por %p505, %p506
      %p508 = scmp.ne.s32.totalorder %s500, %s503
      %p509 = scmp.eq.s32.totalorder %s30, 0
      %p510 = por %p508, %p509
      %p511 = scmp.ne.s32.totalorder %s500, %s503
      %p512 = scmp.eq.s32.totalorder %s35, 3
      %p513 = por %p511, %p512
      %p514 = scmp.ne.s32.totalorder %s503, %s504
      %p515 = scmp.eq.s32.totalorder %s35, 0
      %p516 = por %p514, %p515
      %p517 = scmp.ne.s32.totalorder %s503, %s504
      %p518 = scmp.eq.s32.totalorder %s36, 3
      %p519 = por %p517, %p518
      %p521 = scmp.ne.s32.totalorder %s504, %s520
      %p522 = scmp.eq.s32.totalorder %s36, 0
      %p523 = por %p521, %p522
      %p524 = scmp.le.s32.totalorder 1, %s30
      %p525 = scmp.lt.s32.totalorder %s30, 5
      %p526 = pnand %p524, %p525
      %p527 = pneg %p526
      // Predicated region
      $region9: #{tpu_custom_call.1} parent=5 // pred_check
        _
      $region10: #{tpu_custom_call.1} parent=5 // pred_check_branch
        %529 = sbr.rel (%p526) target = $region12
      $region11: #{tpu_custom_call.1} parent=5 // pred_region
        %s530 = ssub.s32 %s30, 1
        // Predicated region
        $region13: #{tpu_custom_call.1} parent=11 // pred_check
          %p531 = pneg %p89
        $region14: #{tpu_custom_call.1} parent=11 // pred_check_branch
          %533 = sbr.rel (%p531) target = $region16
        $region15: #{tpu_custom_call.1} parent=11 // pred_region
          _
        $region16: #{tpu_custom_call.1} parent=11 // pred_fallthru
          _
        // Predicated region
        $region17: #{tpu_custom_call.1} parent=11 // pred_check
          %p534 = pneg %p110
        $region18: #{tpu_custom_call.1} parent=11 // pred_check_branch
          %536 = sbr.rel (%p534) target = $region20
        $region19: #{tpu_custom_call.1} parent=11 // pred_region
          _
        $region20: #{tpu_custom_call.1} parent=11 // pred_fallthru
          _
        // Predicated region
        $region21: #{tpu_custom_call.1} parent=11 // pred_check
          %p537 = pneg %p131
        $region22: #{tpu_custom_call.1} parent=11 // pred_check_branch
          %539 = sbr.rel (%p537) target = $region24
        $region23: #{tpu_custom_call.1} parent=11 // pred_region
          _
        $region24: #{tpu_custom_call.1} parent=11 // pred_fallthru
          _
        // Predicated region
        $region25: #{tpu_custom_call.1} parent=11 // pred_check
          %p540 = pneg %p152
        $region26: #{tpu_custom_call.1} parent=11 // pred_check_branch
          %542 = sbr.rel (%p540) target = $region28
        $region27: #{tpu_custom_call.1} parent=11 // pred_region
          _
        $region28: #{tpu_custom_call.1} parent=11 // pred_fallthru
          _
        // Predicated region
        $region29: #{tpu_custom_call.1} parent=11 // pred_check
          %p543 = pneg %p173
        $region30: #{tpu_custom_call.1} parent=11 // pred_check_branch
          %545 = sbr.rel (%p543) target = $region32
        $region31: #{tpu_custom_call.1} parent=11 // pred_region
          _
        $region32: #{tpu_custom_call.1} parent=11 // pred_fallthru
          _
        // Predicated region
        $region33: #{tpu_custom_call.1} parent=11 // pred_check
          %p546 = pneg %p194
        $region34: #{tpu_custom_call.1} parent=11 // pred_check_branch
          %548 = sbr.rel (%p546) target = $region36
        $region35: #{tpu_custom_call.1} parent=11 // pred_region
          _
        $region36: #{tpu_custom_call.1} parent=11 // pred_fallthru
          _
        // Predicated region
        $region37: #{tpu_custom_call.1} parent=11 // pred_check
          %p549 = pneg %p215
        $region38: #{tpu_custom_call.1} parent=11 // pred_check_branch
          %551 = sbr.rel (%p549) target = $region40
        $region39: #{tpu_custom_call.1} parent=11 // pred_region
          _
        $region40: #{tpu_custom_call.1} parent=11 // pred_fallthru
          _
        // Predicated region
        $region41: #{tpu_custom_call.1} parent=11 // pred_check
          %p552 = pneg %p236
        $region42: #{tpu_custom_call.1} parent=11 // pred_check_branch
          %554 = sbr.rel (%p552) target = $region44
        $region43: #{tpu_custom_call.1} parent=11 // pred_region
          _
        $region44: #{tpu_custom_call.1} parent=11 // pred_fallthru
          _
        // Predicated region
        $region45: #{tpu_custom_call.1} parent=11 // pred_check
          %p555 = pneg %p257
        $region46: #{tpu_custom_call.1} parent=11 // pred_check_branch
          %557 = sbr.rel (%p555) target = $region48
        $region47: #{tpu_custom_call.1} parent=11 // pred_region
          _
        $region48: #{tpu_custom_call.1} parent=11 // pred_fallthru
          _
        // Predicated region
        $region49: #{tpu_custom_call.1} parent=11 // pred_check
          %p558 = pneg %p278
        $region50: #{tpu_custom_call.1} parent=11 // pred_check_branch
          %560 = sbr.rel (%p558) target = $region52
        $region51: #{tpu_custom_call.1} parent=11 // pred_region
          _
        $region52: #{tpu_custom_call.1} parent=11 // pred_fallthru
          _
        // Predicated region
        $region53: #{tpu_custom_call.1} parent=11 // pred_check
          %p561 = pneg %p299
        $region54: #{tpu_custom_call.1} parent=11 // pred_check_branch
          %563 = sbr.rel (%p561) target = $region56
        $region55: #{tpu_custom_call.1} parent=11 // pred_region
          _
        $region56: #{tpu_custom_call.1} parent=11 // pred_fallthru
          _
        // Predicated region
        $region57: #{tpu_custom_call.1} parent=11 // pred_check
          %p564 = pneg %p320
        $region58: #{tpu_custom_call.1} parent=11 // pred_check_branch
          %566 = sbr.rel (%p564) target = $region60
        $region59: #{tpu_custom_call.1} parent=11 // pred_region
          _
        $region60: #{tpu_custom_call.1} parent=11 // pred_fallthru
          _
        // Predicated region
        $region61: #{tpu_custom_call.1} parent=11 // pred_check
          %p567 = pneg %p341
        $region62: #{tpu_custom_call.1} parent=11 // pred_check_branch
          %569 = sbr.rel (%p567) target = $region64
        $region63: #{tpu_custom_call.1} parent=11 // pred_region
          _
        $region64: #{tpu_custom_call.1} parent=11 // pred_fallthru
          _
        // Predicated region
        $region65: #{tpu_custom_call.1} parent=11 // pred_check
          %p570 = pneg %p362
        $region66: #{tpu_custom_call.1} parent=11 // pred_check_branch
          %572 = sbr.rel (%p570) target = $region68
        $region67: #{tpu_custom_call.1} parent=11 // pred_region
          _
        $region68: #{tpu_custom_call.1} parent=11 // pred_fallthru
          _
        // Predicated region
        $region69: #{tpu_custom_call.1} parent=11 // pred_check
          %p573 = pneg %p383
        $region70: #{tpu_custom_call.1} parent=11 // pred_check_branch
          %575 = sbr.rel (%p573) target = $region72
        $region71: #{tpu_custom_call.1} parent=11 // pred_region
          _
        $region72: #{tpu_custom_call.1} parent=11 // pred_fallthru
          _
        // Predicated region
        $region73: #{tpu_custom_call.1} parent=11 // pred_check
          %p576 = pneg %p404
        $region74: #{tpu_custom_call.1} parent=11 // pred_check_branch
          %578 = sbr.rel (%p576) target = $region76
        $region75: #{tpu_custom_call.1} parent=11 // pred_region
          _
        $region76: #{tpu_custom_call.1} parent=11 // pred_fallthru
          _
        // Predicated region
        $region77: #{tpu_custom_call.1} parent=11 // pred_check
          %p579 = pneg %p425
        $region78: #{tpu_custom_call.1} parent=11 // pred_check_branch
          %581 = sbr.rel (%p579) target = $region80
        $region79: #{tpu_custom_call.1} parent=11 // pred_region
          _
        $region80: #{tpu_custom_call.1} parent=11 // pred_fallthru
          _
        // Predicated region
        $region81: #{tpu_custom_call.1} parent=11 // pred_check
          %p582 = pneg %p446
        $region82: #{tpu_custom_call.1} parent=11 // pred_check_branch
          %584 = sbr.rel (%p582) target = $region84
        $region83: #{tpu_custom_call.1} parent=11 // pred_region
          _
        $region84: #{tpu_custom_call.1} parent=11 // pred_fallthru
          _
        // Predicated region
        $region85: #{tpu_custom_call.1} parent=11 // pred_check
          %p585 = pneg %p467
        $region86: #{tpu_custom_call.1} parent=11 // pred_check_branch
          %587 = sbr.rel (%p585) target = $region88
        $region87: #{tpu_custom_call.1} parent=11 // pred_region
          _
        $region88: #{tpu_custom_call.1} parent=11 // pred_fallthru
          _
        // Predicated region
        $region89: #{tpu_custom_call.1} parent=11 // pred_check
          %p588 = pneg %p488
        $region90: #{tpu_custom_call.1} parent=11 // pred_check_branch
          %590 = sbr.rel (%p588) target = $region92
        $region91: #{tpu_custom_call.1} parent=11 // pred_region
          _
        $region92: #{tpu_custom_call.1} parent=11 // pred_fallthru
          _
      $region12: #{tpu_custom_call.1} parent=5 // pred_fallthru
        _
      %p591 = scmp.lt.s32.totalorder %s30, 4
      // Predicated region
      $region93: #{tpu_custom_call.1} parent=5 // pred_check
        %p592 = pneg %p591
      $region94: #{tpu_custom_call.1} parent=5 // pred_check_branch
        %594 = sbr.rel (%p592) target = $region96
      $region95: #{tpu_custom_call.1} parent=5 // pred_region
        // Predicated region
        $region97: #{tpu_custom_call.1} parent=95 // pred_check
          %p595 = pneg %p62
        $region98: #{tpu_custom_call.1} parent=95 // pred_check_branch
          %597 = sbr.rel (%p595) target = $region100
        $region99: #{tpu_custom_call.1} parent=95 // pred_region
          %p598 = scmp.lt.s32.totalorder %s37, 1
          %s599 = scalar_select %p598, %s37, 1
          %s600 = smul.addr %s599, 2
          %s601 = smul.addr %s600, 8
          %s602 = scalar_lea.vmem %s0, %s601
        $region100: #{tpu_custom_call.1} parent=95 // pred_fallthru
          _
      $region96: #{tpu_custom_call.1} parent=5 // pred_fallthru
        _
      %p603 = scmp.le.s32.totalorder 1, %s30
      %p604 = scmp.lt.s32.totalorder %s30, 5
      %p605 = pnand %p603, %p604
      %p606 = pneg %p605
      // Predicated region
      $region101: #{tpu_custom_call.1} parent=5 // pred_check
        _
      $region102: #{tpu_custom_call.1} parent=5 // pred_check_branch
        %608 = sbr.rel (%p605) target = $region104
      $region103: #{tpu_custom_call.1} parent=5 // pred_region
        %s609 = ssub.s32 %s30, 1
        %p610 = scmp.lt.s32.totalorder %s39, 1
        %s611 = scalar_select %p610, %s39, 1
        %s612 = smul.addr %s611, 2
        %s613 = smul.addr %s612, 8
        %s614 = scalar_lea.vmem %s0, %s613
        %p615 = pneg %p68
        %p616 = pneg %p65
        %p617 = pneg %p89
        %p618 = pneg %p86
        %p619 = pneg %p110
        %p620 = pneg %p107
        %p621 = pneg %p131
        %p622 = pneg %p128
        %p623 = pneg %p152
        %p624 = pneg %p149
        %p625 = pneg %p173
        %p626 = pneg %p170
        %p627 = pneg %p194
        %p628 = pneg %p191
        %p629 = pneg %p215
        %p630 = pneg %p212
        %p631 = pneg %p236
        %p632 = pneg %p233
        %p633 = pneg %p257
        %p634 = pneg %p254
        %p635 = pneg %p278
        %p636 = pneg %p275
        %p637 = pneg %p299
        %p638 = pneg %p296
        %p639 = pneg %p320
        %p640 = pneg %p317
        %p641 = pneg %p341
        %p642 = pneg %p338
        %p643 = pneg %p362
        %p644 = pneg %p359
        %p645 = pneg %p383
        %p646 = pneg %p380
        %p647 = pneg %p404
        %p648 = pneg %p401
        %p649 = pneg %p425
        %p650 = pneg %p422
        %p651 = pneg %p446
        %p652 = pneg %p443
        %p653 = pneg %p467
        %p654 = pneg %p464
        %p655 = pneg %p488
        %p656 = pneg %p485
        %p657 = pneg %p516
        %p658 = pneg %p513
        %s659 = sand.u32 %s503, 1
        %s660 = scalar_lea.sflag [#allocation7], %s659
        %s661 = sand.u32 %s503, 1
        %s662 = smul.addr %s661, 8
        %s663 = scalar_lea.vmem [#allocation6], %s662
        %p664 = scmp.lt.s32.totalorder %s39, 1
        %s665 = scalar_select %p664, %s39, 1
        %s666 = smul.addr %s665, 2
        %s667 = smul.addr %s666, 8
        %s668 = scalar_lea.vmem %s0, %s667
        %p670 = scmp.eq.s32.totalorder %s40, 0
        // Predicated region
        $region105: #{tpu_custom_call.1} parent=103 // pred_check
          %p671 = pneg %p670
        $region106: #{tpu_custom_call.1} parent=103 // pred_check_branch
          %673 = sbr.rel (%p671) target = $region108
        $region107: #{tpu_custom_call.1} parent=103 // pred_region
          %v674 = vld [vmem:[%s668] sm:$0xff]
          %v675 = vld [vmem:[%s668 + $0x8] sm:$0xff]
          %v676 = vld [vmem:[%s1] sm:$0x3]
          %vm677 = vcmask 261120
          %v678 = vsel %vm677, %v674, 0.0
          %679 = vadd.xlane.f32.xlu0 %v678
          %v680 = vpop.xlane.xlu0 %679
          %v681 = vsel %vm677, %v675, 0.0
          %682 = vadd.xlane.f32.xlu0 %v681
          %v683 = vpop.xlane.xlu0 %682
          %v684 = vrcp.pop 32.0
          %v685 = vmul.f32 32.0, %v684
          %v686 = vsub.f32 1.0, %v685
          %v687 = vmul.f32 %v684, %v686
          %v688 = vadd.f32 %v684, %v687
          %vm689 = vweird.f32 %v684
          %v690 = vsel %vm689, %v684, %v688
          %v691 = vmul.f32 %v680, %v690
          %v692 = vmul.f32 %v683, %v690
          %v693 = vsub.f32 %v674, %v691
          %v694 = vsub.f32 %v675, %v692
          %v695 = vmul.f32 %v693, %v693
          %v696 = vmul.f32 %v694, %v694
          %v697 = vsel %vm677, %v695, 0.0
          %698 = vadd.xlane.f32.xlu0 %v697
          %v699 = vpop.xlane.xlu0 %698
          %v700 = vsel %vm677, %v696, 0.0
          %701 = vadd.xlane.f32.xlu0 %v700
          %v702 = vpop.xlane.xlu0 %701
          %v703 = vmul.f32 %v699, %v690
          %v704 = vmul.f32 %v702, %v690
          %v705 = vadd.f32 %v703, 1e-06
          %v706 = vadd.f32 %v704, 1e-06
          %v707 = vrsqrt.pop %v705
          %v708 = vmul.f32 %v707, %v705
          %v709 = vmul.f32 %v708, %v707
          %v710 = vmul.f32 0.5, %v709
          %v711 = vsub.f32 1.5, %v710
          %v712 = vmul.f32 %v707, %v711
          %vm713 = vweird.f32 %v705
          %vm714 = vweird.f32 %v707
          %vm715 = vmor %vm713, %vm714
          %v716 = vsel %vm715, %v707, %v712
          %v717 = vrsqrt.pop %v706
          %v718 = vmul.f32 %v717, %v706
          %v719 = vmul.f32 %v718, %v717
          %v720 = vmul.f32 0.5, %v719
          %v721 = vsub.f32 1.5, %v720
          %v722 = vmul.f32 %v717, %v721
          %vm723 = vweird.f32 %v706
          %vm724 = vweird.f32 %v717
          %vm725 = vmor %vm723, %vm724
          %v726 = vsel %vm725, %v717, %v722
          %v727 = vmul.f32 %v693, %v716
          %v728 = vmul.f32 %v694, %v726
          %v729 = vperm.slane %v676, 0
          %v730 = vmul.f32 %v727, %v729
          %v731 = vmul.f32 %v728, %v729
          %v732 = vperm.slane %v676, 1
          %v733 = vadd.f32 %v730, %v732
          %v734 = vadd.f32 %v731, %v732
          %v735 = vpack.c.bf16 %v734, %v733
          %v736 = vld [vmem:[%s4] sm:$0xf]
          %v737 = vld [vmem:[%s4 + $0x4] sm:$0xf]
          %v738 = vld [vmem:[%s4 + $0x8] sm:$0xf]
          %v739 = vld [vmem:[%s4 + $0xc] sm:$0xf]
          %v740 = vld [vmem:[%s5] sm:$0x1]
          %v742 = vperm.slane %v740, 0
          %v748 = vunpack.c.l.b16 %v736
          %v749 = vunpack.c.l.b16 %v737
          %v750 = vunpack.c.l.b16 %v738
          %v751 = vunpack.c.l.b16 %v739
          %v752 = vpack.c.b16 %v749, %v748
          %v753 = vpack.c.b16 %v751, %v750
          %v757 = vsel %vm677, %v735, 0
          %759 = vmatpush.bf16.msra.mxu0 0
          %760 = vmatpush.bf16.msra.mxu0 0
          %761 = vmatpush.bf16.msra.mxu0 0
          %762 = vmatpush.bf16.msra.mxu0 0
          %763 = vmatpush.bf16.msra.mxu0 0
          %764 = vmatpush.bf16.msra.mxu0 0
          %765 = vmatpush.bf16.msra.mxu0 %v753
          %766 = vmatpush.bf16.msra.mxu0 %v752
          %767 = vmatmul.bf16.gmra.mxu0 %v757
          %v768 = vpop.f32.mrf.mxu0
          %v769 = vadd.f32 %v742, %v768
          %v770 = vpop.f32.mrf.mxu0
          %v771 = vadd.f32 %v742, %v770
          %772 = vdwg.mxu0
          %v773 = vld [vmem:[%s6] sm:$0x3]
          %v774 = vperm.slane %v773, 0
          %v775 = vmul.f32 %v769, %v774
          %v776 = vmul.f32 %v771, %v774
          %v777 = vperm.slane %v773, 1
          %v778 = vadd.f32 %v775, %v777
          %v779 = vadd.f32 %v776, %v777
          %v780 = vmax.f32 %v778, 0.0
          %v781 = vmax.f32 %v779, 0.0
          %vm782 = vcmask 64512
          %783 = vst.msk [vmem:[#allocation2] sm:$0xff] %vm782, %v780
          %784 = vst.msk [vmem:[#allocation2 + $0x8] sm:$0xff] %vm782, %v781
          %v785 = vld [vmem:[#allocation2] ss:$4 sm:$0xf]
          %s786 = scalar_lea.vmem [#allocation2], 1
          %v787 = vld [vmem:[%s786] ss:$4 sm:$0xf]
          %s788 = scalar_lea.vmem [#allocation2], 2
          %v789 = vld [vmem:[%s788] ss:$4 sm:$0xf]
          %s790 = scalar_lea.vmem [#allocation2], 3
          %v791 = vld [vmem:[%s790] ss:$4 sm:$0xf]
          %v792 = vadd.f32 %v785, %v787
          %v793 = vsub.f32 %v785, %v787
          %v794 = vadd.f32 %v789, %v791
          %v795 = vsub.f32 %v789, %v791
          %v796 = vadd.f32 %v792, %v794
          %v797 = vmul.f32 %v796, 0.5
          %v798 = vsub.f32 %v792, %v794
          %v799 = vmul.f32 %v798, 0.5
          %v800 = vadd.f32 %v793, %v795
          %v801 = vmul.f32 %v800, 0.5
          %v802 = vsub.f32 %v793, %v795
          %v803 = vmul.f32 %v802, 0.5
          %805 = vrot.lane.b32.xlu0 %v799, 8
          %v806 = vpop.permute.xlu0 %805
          %809 = vrot.lane.b32.xlu0 %v801, 16
          %v810 = vpop.permute.xlu0 %809
          %813 = vrot.lane.b32.xlu0 %v803, 24
          %v814 = vpop.permute.xlu0 %813
          %v816 = vsel %vm782, %v797, %v806
          %vm817 = vcmask 130048
          %v818 = vsel %vm817, %v816, %v810
          %vm819 = vcmask 195584
          %v820 = vsel %vm819, %v818, %v814
          %v822 = vrot.slane %v820, 7
          %vm824 = vcmask 1040384
          %v825 = vsel %vm824, 0.0, %v822
          %v826 = vrot.slane %v820, 1
          %vm828 = vcmask 1042432
          %v829 = vsel %vm828, %v826, 0.0
          %830 = vrot.lane.b32.xlu0 %v820, 32
          %v831 = vpop.permute.xlu0 %830
          %834 = vrot.lane.b32.xlu0 %v829, 64
          %v835 = vpop.permute.xlu0 %834
          %v837 = vsel %vm677, %v825, %v831
          %vm838 = vcmask 523264
          %v839 = vsel %vm838, %v837, %v835
          %v840 = vpack.c.bf16 %v839, %v839
          %v841 = vld [vmem:[%s7] sm:$0xf]
          %v842 = vld [vmem:[%s7 + $0x4] sm:$0xf]
          %v843 = vld [vmem:[%s7 + $0x8] sm:$0xf]
          %v844 = vld [vmem:[%s7 + $0xc] sm:$0xf]
          %v845 = vld [vmem:[%s7 + $0x10] sm:$0xf]
          %v846 = vld [vmem:[%s7 + $0x14] sm:$0xf]
          %v847 = vld [vmem:[%s7 + $0x18] sm:$0xf]
          %v848 = vld [vmem:[%s7 + $0x1c] sm:$0xf]
          %v849 = vld [vmem:[%s7 + $0x20] sm:$0xf]
          %v850 = vld [vmem:[%s7 + $0x24] sm:$0xf]
          %v851 = vld [vmem:[%s7 + $0x28] sm:$0xf]
          %v852 = vld [vmem:[%s7 + $0x2c] sm:$0xf]
          %v853 = vld [vmem:[%s8] sm:$0x1]
          %v855 = vperm.slane %v853, 0
          %v869 = vunpack.c.l.b16 %v841
          %v870 = vunpack.c.l.b16 %v842
          %v871 = vunpack.c.l.b16 %v843
          %v872 = vunpack.c.l.b16 %v844
          %v873 = vunpack.c.l.b16 %v845
          %v874 = vunpack.c.l.b16 %v846
          %v875 = vunpack.c.l.b16 %v847
          %v876 = vunpack.c.l.b16 %v848
          %v877 = vunpack.c.l.b16 %v849
          %v878 = vunpack.c.l.b16 %v850
          %v879 = vunpack.c.l.b16 %v851
          %v880 = vunpack.c.l.b16 %v852
          %v881 = vpack.c.b16 %v870, %v869
          %v882 = vpack.c.b16 %v872, %v871
          %v883 = vpack.c.b16 %v874, %v873
          %v884 = vpack.c.b16 %v876, %v875
          %v885 = vpack.c.b16 %v878, %v877
          %v886 = vpack.c.b16 %v880, %v879
          %vm893 = vcmask 785408
          %v895 = vsel %vm893, %v840, 0
          %897 = vmatpush.bf16.msra.mxu0 0
          %898 = vmatpush.bf16.msra.mxu0 0
          %899 = vmatpush.bf16.msra.mxu0 %v886
          %900 = vmatpush.bf16.msra.mxu0 %v885
          %901 = vmatpush.bf16.msra.mxu0 %v884
          %902 = vmatpush.bf16.msra.mxu0 %v883
          %903 = vmatpush.bf16.msra.mxu0 %v882
          %904 = vmatpush.bf16.msra.mxu0 %v881
          %905 = vmatmul.bf16.gmra.mxu0 %v895
          %v906 = vpop.f32.mrf.mxu0
          %v907 = vadd.f32 %v855, %v906
          %v908 = vpop.f32.mrf.mxu0
          %909 = vdwg.mxu0
          %v910 = vld [vmem:[%s9] sm:$0x3]
          %v911 = vperm.slane %v910, 0
          %v912 = vmul.f32 %v907, %v911
          %v913 = vperm.slane %v910, 1
          %v914 = vadd.f32 %v912, %v913
          %v915 = vmax.f32 %v914, 0.0
          %917 = vrot.lane.b32.xlu0 %v915, 120
          %v918 = vpop.permute.xlu0 %917
          %v920 = vadd.f32 %v915, %v918
          %v921 = vsub.f32 %v915, %v918
          %923 = vrot.lane.b32.xlu0 %v921, 112
          %v924 = vpop.permute.xlu0 %923
          %v926 = vsub.f32 %v921, %v924
          %v927 = vmul.f32 %v926, 0.5
          %928 = vst [vmem:[#allocation3] ss:$4 sm:$0xf] %v927
          %v929 = vadd.f32 %v921, %v924
          %v930 = vmul.f32 %v929, 0.5
          %s931 = scalar_lea.vmem [#allocation3], 1
          %932 = vst [vmem:[%s931] ss:$4 sm:$0xf] %v930
          %934 = vrot.lane.b32.xlu0 %v920, 112
          %v935 = vpop.permute.xlu0 %934
          %v937 = vsub.f32 %v920, %v935
          %v938 = vmul.f32 %v937, 0.5
          %s939 = scalar_lea.vmem [#allocation3], 2
          %940 = vst [vmem:[%s939] ss:$4 sm:$0xf] %v938
          %v941 = vadd.f32 %v920, %v935
          %v942 = vmul.f32 %v941, 0.5
          %s943 = scalar_lea.vmem [#allocation3], 3
          %944 = vst [vmem:[%s943] ss:$4 sm:$0xf] %v942
          %v945 = vld [vmem:[%s10] sm:$0x3]
          %vm946 = vcmask 257024
          %v947 = vsel %vm946, %v915, 0.0
          %948 = vadd.xlane.f32.xlu0 %v947
          %v949 = vpop.xlane.xlu0 %948
          %v950 = vmul.f32 %v949, %v690
          %v951 = vsub.f32 %v915, %v950
          %v952 = vmul.f32 %v951, %v951
          %v953 = vsel %vm946, %v952, 0.0
          %954 = vadd.xlane.f32.xlu0 %v953
          %v955 = vpop.xlane.xlu0 %954
          %v956 = vmul.f32 %v955, %v690
          %v957 = vadd.f32 %v956, 1e-05
          %v958 = vrsqrt.pop %v957
          %v959 = vmul.f32 %v958, %v957
          %v960 = vmul.f32 %v959, %v958
          %v961 = vmul.f32 0.5, %v960
          %v962 = vsub.f32 1.5, %v961
          %v963 = vmul.f32 %v958, %v962
          %vm964 = vweird.f32 %v957
          %vm965 = vweird.f32 %v958
          %vm966 = vmor %vm964, %vm965
          %v967 = vsel %vm966, %v958, %v963
          %v968 = vmul.f32 %v951, %v967
          %v969 = vperm.slane %v945, 0
          %v970 = vmul.f32 %v968, %v969
          %v971 = vperm.slane %v945, 1
          %v972 = vadd.f32 %v970, %v971
          %v973 = vpack.c.bf16 %v972, %v972
          %v974 = vld [vmem:[%s11] sm:$0xf]
          %v975 = vld [vmem:[%s11 + $0x4] sm:$0xf]
          %v976 = vld [vmem:[%s11 + $0x8] sm:$0xf]
          %v977 = vld [vmem:[%s11 + $0xc] sm:$0xf]
          %v978 = vld [vmem:[%s12] sm:$0x1]
          %v980 = vperm.slane %v978, 0
          %v986 = vunpack.c.l.b16 %v974
          %v987 = vunpack.c.l.b16 %v975
          %v988 = vunpack.c.l.b16 %v976
          %v989 = vunpack.c.l.b16 %v977
          %v990 = vpack.c.b16 %v987, %v986
          %v991 = vpack.c.b16 %v989, %v988
          %v995 = vsel %vm677, %v973, 0
          %997 = vmatpush.bf16.msra.mxu0 0
          %998 = vmatpush.bf16.msra.mxu0 0
          %999 = vmatpush.bf16.msra.mxu0 0
          %1000 = vmatpush.bf16.msra.mxu0 0
          %1001 = vmatpush.bf16.msra.mxu0 0
          %1002 = vmatpush.bf16.msra.mxu0 0
          %1003 = vmatpush.bf16.msra.mxu0 %v991
          %1004 = vmatpush.bf16.msra.mxu0 %v990
          %1005 = vmatmul.bf16.gmra.mxu0 %v995
          %v1006 = vpop.f32.mrf.mxu0
          %v1007 = vadd.f32 %v980, %v1006
          %v1008 = vpop.f32.mrf.mxu0
          %1009 = vdwg.mxu0
          %vm1010 = vcmask 519168
          %1011 = vst.msk [vmem:[#allocation4] sm:$0xf] %vm1010, %v1007
        $region108: #{tpu_custom_call.1} parent=103 // pred_fallthru
          _
        %s1012 = smul.u32 %s40, 8
        %s1013 = scalar_lea.vmem %s668, %s1012
        %v1014 = vld [vmem:[%s1013] sm:$0xff]
        %v1015 = vld [vmem:[%s1] sm:$0x3]
        %vm1016 = vcmask 261120
        %v1017 = vsel %vm1016, %v1014, 0.0
        %1018 = vadd.xlane.f32.xlu0 %v1017
        %v1019 = vpop.xlane.xlu0 %1018
        %v1020 = vrcp.pop 32.0
        %v1021 = vmul.f32 32.0, %v1020
        %v1022 = vsub.f32 1.0, %v1021
        %v1023 = vmul.f32 %v1020, %v1022
        %v1024 = vadd.f32 %v1020, %v1023
        %vm1025 = vweird.f32 %v1020
        %v1026 = vsel %vm1025, %v1020, %v1024
        %v1027 = vmul.f32 %v1019, %v1026
        %v1028 = vsub.f32 %v1014, %v1027
        %v1029 = vmul.f32 %v1028, %v1028
        %v1030 = vsel %vm1016, %v1029, 0.0
        %1031 = vadd.xlane.f32.xlu0 %v1030
        %v1032 = vpop.xlane.xlu0 %1031
        %v1033 = vmul.f32 %v1032, %v1026
        %v1034 = vadd.f32 %v1033, 1e-06
        %v1035 = vrsqrt.pop %v1034
        %v1036 = vmul.f32 %v1035, %v1034
        %v1037 = vmul.f32 %v1036, %v1035
        %v1038 = vmul.f32 0.5, %v1037
        %v1039 = vsub.f32 1.5, %v1038
        %v1040 = vmul.f32 %v1035, %v1039
        %vm1041 = vweird.f32 %v1034
        %vm1042 = vweird.f32 %v1035
        %vm1043 = vmor %vm1041, %vm1042
        %v1044 = vsel %vm1043, %v1035, %v1040
        %v1045 = vmul.f32 %v1028, %v1044
        %v1046 = vperm.slane %v1015, 0
        %v1047 = vmul.f32 %v1045, %v1046
        %v1048 = vperm.slane %v1015, 1
        %v1049 = vadd.f32 %v1047, %v1048
        %v1050 = vpack.c.bf16 %v1049, %v1049
        %v1051 = vld [vmem:[%s2] sm:$0xf]
        %v1052 = vld [vmem:[%s2 + $0x4] sm:$0xf]
        %v1053 = vld [vmem:[%s2 + $0x8] sm:$0xf]
        %v1054 = vld [vmem:[%s2 + $0xc] sm:$0xf]
        %v1055 = vld [vmem:[%s3] sm:$0x1]
        %v1057 = vperm.slane %v1055, 0
        %v1063 = vunpack.c.l.b16 %v1051
        %v1064 = vunpack.c.l.b16 %v1052
        %v1065 = vunpack.c.l.b16 %v1053
        %v1066 = vunpack.c.l.b16 %v1054
        %v1067 = vpack.c.b16 %v1064, %v1063
        %v1068 = vpack.c.b16 %v1066, %v1065
        %v1072 = vsel %vm1016, %v1050, 0
        %1074 = vmatpush.bf16.msra.mxu0 0
        %1075 = vmatpush.bf16.msra.mxu0 0
        %1076 = vmatpush.bf16.msra.mxu0 0
        %1077 = vmatpush.bf16.msra.mxu0 0
        %1078 = vmatpush.bf16.msra.mxu0 0
        %1079 = vmatpush.bf16.msra.mxu0 0
        %1080 = vmatpush.bf16.msra.mxu0 %v1068
        %1081 = vmatpush.bf16.msra.mxu0 %v1067
        %1082 = vmatmul.bf16.gmra.mxu0 %v1072
        %v1083 = vpop.f32.mrf.mxu0
        %v1084 = vadd.f32 %v1057, %v1083
        %v1085 = vpop.f32.mrf.mxu0
        %1086 = vdwg.mxu0
        %v1087 = vld [vmem:[#allocation4] sm:$0xf]
        %v1088 = vpack.c.bf16 %v1087, %v1087
        %v1089 = vpack.c.bf16 %v1084, %v1084
        %vm1090 = vcmask 64512
        %v1092 = vsel %vm1090, %v1089, 0
        %v1095 = vsel %vm1090, %v1088, 0
        %1097 = vmatpush.bf16.xpose.msra.mxu0 0
        %1098 = vmatpush.bf16.xpose.msra.mxu0 0
        %1099 = vmatpush.bf16.xpose.msra.mxu0 0
        %1100 = vmatpush.bf16.xpose.msra.mxu0 0
        %1101 = vmatpush.bf16.xpose.msra.mxu0 0
        %1102 = vmatpush.bf16.xpose.msra.mxu0 0
        %1103 = vmatpush.bf16.xpose.msra.mxu0 0
        %1104 = vmatpush.bf16.xpose.msra.mxu0 %v1095
        %1105 = vmatmul.bf16.gmra.mxu0 %v1092
        %v1106 = vpop.f32.mrf.mxu0
        %v1107 = vadd.f32 0.0, %v1106
        %v1108 = vpop.f32.mrf.mxu0
        %1109 = vdwg.mxu0
        %v1110 = vmul.f32 %v1107, 0.35355338
        %vm1111 = vcmask 31744
        %v1112 = vsel %vm1111, %v1110, -inf
        %1113 = vmax.xlane.f32.xlu0 %v1112
        %v1114 = vpop.xlane.xlu0 %1113
        %v1115 = vsub.f32 %v1110, %v1114
        %v1116 = vmul.f32 %v1115, 1.442695
        %v1117 = vpow.pop %v1116
        %v1118 = vsel %vm1111, %v1117, 0.0
        %1119 = vadd.xlane.f32.xlu0 %v1118
        %v1120 = vpop.xlane.xlu0 %1119
        %v1121 = vrcp.pop %v1120
        %v1122 = vmul.f32 %v1117, %v1121
        %v1123 = vpack.c.bf16 %v1122, %v1122
        %v1125 = vunpack.c.l.b16 %v1088
        %v1126 = vpack.c.b16 %v1125, %v1125
        %1127 = vrot.lane.b32.xlu0 %v1126, 96
        %v1128 = vpop.permute.xlu0 %1127
        %v1130 = vsel %vm1111, %v1123, 0
        %vm1132 = vcmask 1041408
        %v1134 = vsel %vm1132, %v1128, 0
        %1136 = vmatpush.bf16.msra.mxu0 0
        %1137 = vmatpush.bf16.msra.mxu0 0
        %1138 = vmatpush.bf16.msra.mxu0 0
        %1139 = vmatpush.bf16.msra.mxu0 0
        %1140 = vmatpush.bf16.msra.mxu0 0
        %1141 = vmatpush.bf16.msra.mxu0 0
        %1142 = vmatpush.bf16.msra.mxu0 0
        %1143 = vmatpush.bf16.msra.mxu0 %v1134
        %1144 = vmatmul.bf16.gmra.mxu0 %v1130
        %v1145 = vpop.f32.mrf.mxu0
        %v1146 = vadd.f32 0.0, %v1145
        %v1147 = vpop.f32.mrf.mxu0
        %1148 = vdwg.mxu0
        %1149 = vst.msk [vmem:[#allocation5] sm:$0xff] %vm1090, %v1146
        %1151 = vrot.lane.b32.xlu0 %v1089, 120
        %v1152 = vpop.permute.xlu0 %1151
        %1153 = vrot.lane.b32.xlu0 %v1126, 120
        %v1154 = vpop.permute.xlu0 %1153
        %v1156 = vsel %vm1090, %v1152, 0
        %v1159 = vsel %vm1090, %v1154, 0
        %1161 = vmatpush.bf16.xpose.msra.mxu0 0
        %1162 = vmatpush.bf16.xpose.msra.mxu0 0
        %1163 = vmatpush.bf16.xpose.msra.mxu0 0
        %1164 = vmatpush.bf16.xpose.msra.mxu0 0
        %1165 = vmatpush.bf16.xpose.msra.mxu0 0
        %1166 = vmatpush.bf16.xpose.msra.mxu0 0
        %1167 = vmatpush.bf16.xpose.msra.mxu0 0
        %1168 = vmatpush.bf16.xpose.msra.mxu0 %v1159
        %1169 = vmatmul.bf16.gmra.mxu0 %v1156
        %v1170 = vpop.f32.mrf.mxu0
        %v1171 = vadd.f32 0.0, %v1170
        %v1172 = vpop.f32.mrf.mxu0
        %1173 = vdwg.mxu0
        %v1174 = vmul.f32 %v1171, 0.35355338
        %v1175 = vsel %vm1111, %v1174, -inf
        %1176 = vmax.xlane.f32.xlu0 %v1175
        %v1177 = vpop.xlane.xlu0 %1176
        %v1178 = vsub.f32 %v1174, %v1177
        %v1179 = vmul.f32 %v1178, 1.442695
        %v1180 = vpow.pop %v1179
        %v1181 = vsel %vm1111, %v1180, 0.0
        %1182 = vadd.xlane.f32.xlu0 %v1181
        %v1183 = vpop.xlane.xlu0 %1182
        %v1184 = vrcp.pop %v1183
        %v1185 = vmul.f32 %v1180, %v1184
        %v1186 = vpack.c.bf16 %v1185, %v1185
        %1187 = vrot.lane.b32.xlu0 %v1126, 88
        %v1188 = vpop.permute.xlu0 %1187
        %v1190 = vsel %vm1111, %v1186, 0
        %v1193 = vsel %vm1132, %v1188, 0
        %1195 = vmatpush.bf16.msra.mxu0 0
        %1196 = vmatpush.bf16.msra.mxu0 0
        %1197 = vmatpush.bf16.msra.mxu0 0
        %1198 = vmatpush.bf16.msra.mxu0 0
        %1199 = vmatpush.bf16.msra.mxu0 0
        %1200 = vmatpush.bf16.msra.mxu0 0
        %1201 = vmatpush.bf16.msra.mxu0 0
        %1202 = vmatpush.bf16.msra.mxu0 %v1193
        %1203 = vmatmul.bf16.gmra.mxu0 %v1190
        %v1204 = vpop.f32.mrf.mxu0
        %v1205 = vadd.f32 0.0, %v1204
        %v1206 = vpop.f32.mrf.mxu0
        %1207 = vdwg.mxu0
        %1209 = vrot.lane.b32.xlu0 %v1205, 8
        %v1210 = vpop.permute.xlu0 %1209
        %vm1212 = vcmask 130112
        %1213 = vst.msk [vmem:[#allocation5] sm:$0xff] %vm1212, %v1210
        %1214 = vrot.lane.b32.xlu0 %v1089, 112
        %v1215 = vpop.permute.xlu0 %1214
        %1216 = vrot.lane.b32.xlu0 %v1126, 112
        %v1217 = vpop.permute.xlu0 %1216
        %v1219 = vsel %vm1090, %v1215, 0
        %v1222 = vsel %vm1090, %v1217, 0
        %1224 = vmatpush.bf16.xpose.msra.mxu0 0
        %1225 = vmatpush.bf16.xpose.msra.mxu0 0
        %1226 = vmatpush.bf16.xpose.msra.mxu0 0
        %1227 = vmatpush.bf16.xpose.msra.mxu0 0
        %1228 = vmatpush.bf16.xpose.msra.mxu0 0
        %1229 = vmatpush.bf16.xpose.msra.mxu0 0
        %1230 = vmatpush.bf16.xpose.msra.mxu0 0
        %1231 = vmatpush.bf16.xpose.msra.mxu0 %v1222
        %1232 = vmatmul.bf16.gmra.mxu0 %v1219
        %v1233 = vpop.f32.mrf.mxu0
        %v1234 = vadd.f32 0.0, %v1233
        %v1235 = vpop.f32.mrf.mxu0
        %1236 = vdwg.mxu0
        %v1237 = vmul.f32 %v1234, 0.35355338
        %v1238 = vsel %vm1111, %v1237, -inf
        %1239 = vmax.xlane.f32.xlu0 %v1238
        %v1240 = vpop.xlane.xlu0 %1239
        %v1241 = vsub.f32 %v1237, %v1240
        %v1242 = vmul.f32 %v1241, 1.442695
        %v1243 = vpow.pop %v1242
        %v1244 = vsel %vm1111, %v1243, 0.0
        %1245 = vadd.xlane.f32.xlu0 %v1244
        %v1246 = vpop.xlane.xlu0 %1245
        %v1247 = vrcp.pop %v1246
        %v1248 = vmul.f32 %v1243, %v1247
        %v1249 = vpack.c.bf16 %v1248, %v1248
        %1250 = vrot.lane.b32.xlu0 %v1126, 80
        %v1251 = vpop.permute.xlu0 %1250
        %v1253 = vsel %vm1111, %v1249, 0
        %v1256 = vsel %vm1132, %v1251, 0
        %1258 = vmatpush.bf16.msra.mxu0 0
        %1259 = vmatpush.bf16.msra.mxu0 0
        %1260 = vmatpush.bf16.msra.mxu0 0
        %1261 = vmatpush.bf16.msra.mxu0 0
        %1262 = vmatpush.bf16.msra.mxu0 0
        %1263 = vmatpush.bf16.msra.mxu0 0
        %1264 = vmatpush.bf16.msra.mxu0 0
        %1265 = vmatpush.bf16.msra.mxu0 %v1256
        %1266 = vmatmul.bf16.gmra.mxu0 %v1253
        %v1267 = vpop.f32.mrf.mxu0
        %v1268 = vadd.f32 0.0, %v1267
        %v1269 = vpop.f32.mrf.mxu0
        %1270 = vdwg.mxu0
        %1272 = vrot.lane.b32.xlu0 %v1268, 16
        %v1273 = vpop.permute.xlu0 %1272
        %vm1275 = vcmask 195712
        %1276 = vst.msk [vmem:[#allocation5] sm:$0xff] %vm1275, %v1273
        %1277 = vrot.lane.b32.xlu0 %v1089, 104
        %v1278 = vpop.permute.xlu0 %1277
        %1279 = vrot.lane.b32.xlu0 %v1126, 104
        %v1280 = vpop.permute.xlu0 %1279
        %v1282 = vsel %vm1090, %v1278, 0
        %v1285 = vsel %vm1090, %v1280, 0
        %1287 = vmatpush.bf16.xpose.msra.mxu0 0
        %1288 = vmatpush.bf16.xpose.msra.mxu0 0
        %1289 = vmatpush.bf16.xpose.msra.mxu0 0
        %1290 = vmatpush.bf16.xpose.msra.mxu0 0
        %1291 = vmatpush.bf16.xpose.msra.mxu0 0
        %1292 = vmatpush.bf16.xpose.msra.mxu0 0
        %1293 = vmatpush.bf16.xpose.msra.mxu0 0
        %1294 = vmatpush.bf16.xpose.msra.mxu0 %v1285
        %1295 = vmatmul.bf16.gmra.mxu0 %v1282
        %v1296 = vpop.f32.mrf.mxu0
        %v1297 = vadd.f32 0.0, %v1296
        %v1298 = vpop.f32.mrf.mxu0
        %1299 = vdwg.mxu0
        %v1300 = vmul.f32 %v1297, 0.35355338
        %v1301 = vsel %vm1111, %v1300, -inf
        %1302 = vmax.xlane.f32.xlu0 %v1301
        %v1303 = vpop.xlane.xlu0 %1302
        %v1304 = vsub.f32 %v1300, %v1303
        %v1305 = vmul.f32 %v1304, 1.442695
        %v1306 = vpow.pop %v1305
        %v1307 = vsel %vm1111, %v1306, 0.0
        %1308 = vadd.xlane.f32.xlu0 %v1307
        %v1309 = vpop.xlane.xlu0 %1308
        %v1310 = vrcp.pop %v1309
        %v1311 = vmul.f32 %v1306, %v1310
        %v1312 = vpack.c.bf16 %v1311, %v1311
        %1313 = vrot.lane.b32.xlu0 %v1126, 72
        %v1314 = vpop.permute.xlu0 %1313
        %v1316 = vsel %vm1111, %v1312, 0
        %v1319 = vsel %vm1132, %v1314, 0
        %1321 = vmatpush.bf16.msra.mxu0 0
        %1322 = vmatpush.bf16.msra.mxu0 0
        %1323 = vmatpush.bf16.msra.mxu0 0
        %1324 = vmatpush.bf16.msra.mxu0 0
        %1325 = vmatpush.bf16.msra.mxu0 0
        %1326 = vmatpush.bf16.msra.mxu0 0
        %1327 = vmatpush.bf16.msra.mxu0 0
        %1328 = vmatpush.bf16.msra.mxu0 %v1319
        %1329 = vmatmul.bf16.gmra.mxu0 %v1316
        %v1330 = vpop.f32.mrf.mxu0
        %v1331 = vadd.f32 0.0, %v1330
        %v1332 = vpop.f32.mrf.mxu0
        %1333 = vdwg.mxu0
        %1335 = vrot.lane.b32.xlu0 %v1331, 24
        %v1336 = vpop.permute.xlu0 %1335
        %vm1338 = vcmask 261312
        %1339 = vst.msk [vmem:[#allocation5] sm:$0xff] %vm1338, %v1336
        %v1340 = vld [vmem:[#allocation5] sm:$0xff]
        %s1341 = scalar_lea.vmem [#allocation3], %s1012
        %v1342 = vld [vmem:[%s1341] sm:$0xff]
        %v1343 = vpack.c.bf16 %v1340, %v1340
        %v1344 = vld [vmem:[%s13] sm:$0xf]
        %v1345 = vld [vmem:[%s13 + $0x4] sm:$0xf]
        %v1346 = vld [vmem:[%s13 + $0x8] sm:$0xf]
        %v1347 = vld [vmem:[%s13 + $0xc] sm:$0xf]
        %v1348 = vpack.c.bf16 %v1342, %v1342
        %v1349 = vld [vmem:[%s14] sm:$0xf]
        %v1351 = vsel %vm1090, %v1348, 0
        %vm1353 = vcmask 1043456
        %v1355 = vsel %vm1353, %v1349, 0
        %1357 = vmatpush.bf16.msra.mxu0 0
        %1358 = vmatpush.bf16.msra.mxu0 0
        %1359 = vmatpush.bf16.msra.mxu0 0
        %1360 = vmatpush.bf16.msra.mxu0 0
        %1361 = vmatpush.bf16.msra.mxu0 0
        %1362 = vmatpush.bf16.msra.mxu0 0
        %1363 = vmatpush.bf16.msra.mxu0 0
        %1364 = vmatpush.bf16.msra.mxu0 %v1355
        %1365 = vmatmul.bf16.gmra.mxu0 %v1351
        %v1366 = vpop.f32.mrf.mxu0
        %v1367 = vadd.f32 0.0, %v1366
        %v1368 = vpop.f32.mrf.mxu0
        %1369 = vdwg.mxu0
        %v1374 = vunpack.c.l.b16 %v1344
        %v1375 = vunpack.c.l.b16 %v1345
        %v1376 = vunpack.c.l.b16 %v1346
        %v1377 = vunpack.c.l.b16 %v1347
        %v1378 = vpack.c.b16 %v1375, %v1374
        %v1379 = vpack.c.b16 %v1377, %v1376
        %v1383 = vsel %vm1016, %v1343, 0
        %1385 = vmatpush.bf16.msra.mxu0 0
        %1386 = vmatpush.bf16.msra.mxu0 0
        %1387 = vmatpush.bf16.msra.mxu0 0
        %1388 = vmatpush.bf16.msra.mxu0 0
        %1389 = vmatpush.bf16.msra.mxu0 0
        %1390 = vmatpush.bf16.msra.mxu0 0
        %1391 = vmatpush.bf16.msra.mxu0 %v1379
        %1392 = vmatpush.bf16.msra.mxu0 %v1378
        %1393 = vmatmul.bf16.gmra.mxu0 %v1383
        %v1394 = vpop.f32.mrf.mxu0
        %v1395 = vadd.f32 %v1367, %v1394
        %v1396 = vpop.f32.mrf.mxu0
        %1397 = vdwg.mxu0
        %v1398 = vld [vmem:[%s15] sm:$0x1]
        %v1400 = vperm.slane %v1398, 0
        %v1402 = vadd.f32 %v1395, %v1400
        %v1403 = vadd.f32 %v1014, %v1402
        %v1404 = vld [vmem:[%s16] sm:$0x3]
        %v1405 = vsel %vm1016, %v1403, 0.0
        %1406 = vadd.xlane.f32.xlu0 %v1405
        %v1407 = vpop.xlane.xlu0 %1406
        %v1408 = vmul.f32 %v1407, %v1026
        %v1409 = vsub.f32 %v1403, %v1408
        %v1410 = vmul.f32 %v1409, %v1409
        %v1411 = vsel %vm1016, %v1410, 0.0
        %1412 = vadd.xlane.f32.xlu0 %v1411
        %v1413 = vpop.xlane.xlu0 %1412
        %v1414 = vmul.f32 %v1413, %v1026
        %v1415 = vadd.f32 %v1414, 1e-06
        %v1416 = vrsqrt.pop %v1415
        %v1417 = vmul.f32 %v1416, %v1415
        %v1418 = vmul.f32 %v1417, %v1416
        %v1419 = vmul.f32 0.5, %v1418
        %v1420 = vsub.f32 1.5, %v1419
        %v1421 = vmul.f32 %v1416, %v1420
        %vm1422 = vweird.f32 %v1415
        %vm1423 = vweird.f32 %v1416
        %vm1424 = vmor %vm1422, %vm1423
        %v1425 = vsel %vm1424, %v1416, %v1421
        %v1426 = vmul.f32 %v1409, %v1425
        %v1427 = vperm.slane %v1404, 0
        %v1428 = vmul.f32 %v1426, %v1427
        %v1429 = vperm.slane %v1404, 1
        %v1430 = vadd.f32 %v1428, %v1429
        %v1431 = vpack.c.bf16 %v1430, %v1430
        %v1432 = vld [vmem:[%s17] sm:$0xf]
        %v1433 = vld [vmem:[%s17 + $0x4] sm:$0xf]
        %v1434 = vld [vmem:[%s17 + $0x8] sm:$0xf]
        %v1435 = vld [vmem:[%s17 + $0xc] sm:$0xf]
        %v1436 = vld [vmem:[%s18] sm:$0x1]
        %v1438 = vperm.slane %v1436, 0
        %v1444 = vunpack.c.l.b16 %v1432
        %v1445 = vunpack.c.l.b16 %v1433
        %v1446 = vunpack.c.l.b16 %v1434
        %v1447 = vunpack.c.l.b16 %v1435
        %v1448 = vpack.c.b16 %v1445, %v1444
        %v1449 = vpack.c.b16 %v1447, %v1446
        %v1453 = vsel %vm1016, %v1431, 0
        %1455 = vmatpush.bf16.msra.mxu0 0
        %1456 = vmatpush.bf16.msra.mxu0 0
        %1457 = vmatpush.bf16.msra.mxu0 0
        %1458 = vmatpush.bf16.msra.mxu0 0
        %1459 = vmatpush.bf16.msra.mxu0 0
        %1460 = vmatpush.bf16.msra.mxu0 0
        %1461 = vmatpush.bf16.msra.mxu0 %v1449
        %1462 = vmatpush.bf16.msra.mxu0 %v1448
        %1463 = vmatmul.bf16.gmra.mxu0 %v1453
        %v1464 = vpop.f32.mrf.mxu0
        %v1465 = vadd.f32 %v1438, %v1464
        %v1466 = vpop.f32.mrf.mxu0
        %1467 = vdwg.mxu0
        %v1468 = vmul.f32 %v1465, 0.5
        %v1469 = vmul.f32 %v1465, 0.044715
        %v1470 = vmul.f32 %v1469, %v1465
        %v1471 = vmul.f32 %v1470, %v1465
        %v1472 = vadd.f32 %v1465, %v1471
        %v1473 = vmul.f32 %v1472, 0.7978846
        %v1474 = vtanh.pop %v1473
        %v1475 = vadd.f32 %v1474, 1.0
        %v1476 = vmul.f32 %v1468, %v1475
        %v1477 = vpack.c.bf16 %v1476, %v1476
        %v1478 = vld [vmem:[%s19] sm:$0xf]
        %v1479 = vld [vmem:[%s19 + $0x4] sm:$0xf]
        %v1480 = vld [vmem:[%s19 + $0x8] sm:$0xf]
        %v1481 = vld [vmem:[%s19 + $0xc] sm:$0xf]
        %v1482 = vld [vmem:[%s19 + $0x10] sm:$0xf]
        %v1483 = vld [vmem:[%s19 + $0x14] sm:$0xf]
        %v1484 = vld [vmem:[%s19 + $0x18] sm:$0xf]
        %v1485 = vld [vmem:[%s19 + $0x1c] sm:$0xf]
        %v1486 = vld [vmem:[%s19 + $0x20] sm:$0xf]
        %v1487 = vld [vmem:[%s19 + $0x24] sm:$0xf]
        %v1488 = vld [vmem:[%s19 + $0x28] sm:$0xf]
        %v1489 = vld [vmem:[%s19 + $0x2c] sm:$0xf]
        %v1490 = vld [vmem:[%s19 + $0x30] sm:$0xf]
        %v1491 = vld [vmem:[%s19 + $0x34] sm:$0xf]
        %v1492 = vld [vmem:[%s19 + $0x38] sm:$0xf]
        %v1493 = vld [vmem:[%s19 + $0x3c] sm:$0xf]
        %v1494 = vld [vmem:[%s20] sm:$0x1]
        %v1496 = vperm.slane %v1494, 0
        %v1514 = vunpack.c.l.b16 %v1478
        %v1515 = vunpack.c.l.b16 %v1479
        %v1516 = vunpack.c.l.b16 %v1480
        %v1517 = vunpack.c.l.b16 %v1481
        %v1518 = vunpack.c.l.b16 %v1482
        %v1519 = vunpack.c.l.b16 %v1483
        %v1520 = vunpack.c.l.b16 %v1484
        %v1521 = vunpack.c.l.b16 %v1485
        %v1522 = vunpack.c.l.b16 %v1486
        %v1523 = vunpack.c.l.b16 %v1487
        %v1524 = vunpack.c.l.b16 %v1488
        %v1525 = vunpack.c.l.b16 %v1489
        %v1526 = vunpack.c.l.b16 %v1490
        %v1527 = vunpack.c.l.b16 %v1491
        %v1528 = vunpack.c.l.b16 %v1492
        %v1529 = vunpack.c.l.b16 %v1493
        %v1530 = vpack.c.b16 %v1515, %v1514
        %v1531 = vpack.c.b16 %v1517, %v1516
        %v1532 = vpack.c.b16 %v1519, %v1518
        %v1533 = vpack.c.b16 %v1521, %v1520
        %v1534 = vpack.c.b16 %v1523, %v1522
        %v1535 = vpack.c.b16 %v1525, %v1524
        %v1536 = vpack.c.b16 %v1527, %v1526
        %v1537 = vpack.c.b16 %v1529, %v1528
        %1546 = vmatpush.bf16.msra.mxu0 %v1537
        %1547 = vmatpush.bf16.msra.mxu0 %v1536
        %1548 = vmatpush.bf16.msra.mxu0 %v1535
        %1549 = vmatpush.bf16.msra.mxu0 %v1534
        %1550 = vmatpush.bf16.msra.mxu0 %v1533
        %1551 = vmatpush.bf16.msra.mxu0 %v1532
        %1552 = vmatpush.bf16.msra.mxu0 %v1531
        %1553 = vmatpush.bf16.msra.mxu0 %v1530
        %1554 = vmatmul.bf16.gmra.mxu0 %v1477
        %v1555 = vpop.f32.mrf.mxu0
        %v1556 = vadd.f32 %v1496, %v1555
        %v1557 = vpop.f32.mrf.mxu0
        %1558 = vdwg.mxu0
        %v1559 = vadd.f32 %v1403, %v1556
        %1560 = vst.msk [vmem:[%s663] sm:$0xff] %vm1016, %v1559
        %s1561 = sand.u32 %s503, 1
        %s1562 = scalar_lea.sflag [#allocation7], %s1561
        %s1563 = sand.u32 %s503, 1
        %s1564 = smul.addr %s1563, 8
        %s1565 = scalar_lea.vmem [#allocation6], %s1564
        // Predicated region
        $region109: #{tpu_custom_call.1} parent=103 // pred_check
          %p1566 = pneg %p513
        $region110: #{tpu_custom_call.1} parent=103 // pred_check_branch
          %1568 = sbr.rel (%p1566) target = $region112
        $region111: #{tpu_custom_call.1} parent=103 // pred_region
          %1570 = vsyncadd %s1562, 0
          %s1571 = smul.addr %s39, 2
          %s1572 = sadd.s32 %s40, %s1571
          %s1573 = smul.addr %s1572, 8
          %s1574 = scalar_lea.hbm %s21, %s1573
          %s1576 = sshll.u32 %s1565, 4
          %s1577 = int_to_ptr.vmem [resolvable:$true] %s1576
          %s1578 = sshll.u32 %s1574, 4
          %s1579 = int_to_ptr.hbm [resolvable:$true] %s1578
          %1581 = dma.vmem_to_hbm [thread:$0]  %s1577, 128, %s1579, %s1562
        $region112: #{tpu_custom_call.1} parent=103 // pred_fallthru
          _
      $region104: #{tpu_custom_call.1} parent=5 // pred_fallthru
        _
      %p1582 = scmp.le.s32.totalorder 2, %s30
      // Predicated region
      $region113: #{tpu_custom_call.1} parent=5 // pred_check
        %p1583 = pneg %p1582
      $region114: #{tpu_custom_call.1} parent=5 // pred_check_branch
        %1585 = sbr.rel (%p1583) target = $region116
      $region115: #{tpu_custom_call.1} parent=5 // pred_region
        %s1586 = ssub.s32 %s30, 2
        // Predicated region
        $region117: #{tpu_custom_call.1} parent=115 // pred_check
          %p1587 = pneg %p519
        $region118: #{tpu_custom_call.1} parent=115 // pred_check_branch
          %1589 = sbr.rel (%p1587) target = $region120
        $region119: #{tpu_custom_call.1} parent=115 // pred_region
          %s1590 = sand.u32 %s504, 1
          %s1591 = scalar_lea.sflag [#allocation7], %s1590
          %s1592 = sand.u32 %s504, 1
          %s1593 = smul.addr %s1592, 8
          %s1594 = scalar_lea.vmem [#allocation6], %s1593
          %1596 = dma.done %s1591, 128
        $region120: #{tpu_custom_call.1} parent=115 // pred_fallthru
          _
      $region116: #{tpu_custom_call.1} parent=5 // pred_fallthru
        _
    $region6: #{tpu_custom_call.1} parent=1 // loop_footer
      %s34 = sadd.s32 1, %s30
    $region7: #{tpu_custom_call.1} parent=1 // loop_footer_branch
      %29 = sbr.rel target = $region3
    $region8: #{tpu_custom_call.1} parent=1 // loop_exit
      _
    %1597 = vsyncpa [#allocation7], 1
    %s1598 = scalar_lea.sflag [#allocation7], 1
    %1599 = vsyncpa %s1598, 1

</llo_original>
